<compile_context>
chip_gen: v7x
topology: tpu7x:2x2x1
jax: 0.10.0
libtpu: 0.0.40
codegen_flags: <defaults>
</compile_context>

<pallas_src>
import functools
import math

import jax
import jax.numpy as jnp
from jax import lax
from jax.experimental import pallas as pl
from jax.experimental.pallas import tpu as pltpu

_MXU_DTYPE = jnp.bfloat16                      # MXU input dtype (f32 accum)


# ----------------------------------------------------------------------------
# per-generation configuration
# ----------------------------------------------------------------------------
def _device_kind():
    try:
        return jax.devices()[0].device_kind.lower()
    except Exception:
        return ""


def _vmem_limit_bytes():
    # prefer the hardware query; fall back to device-kind heuristics.
    try:
        cap = int(pltpu.get_tpu_info().vmem_capacity_bytes)
        if cap > 0:
            return max(32 * 1024 * 1024, (cap * 3) // 4)   # 48 MiB on v7x, 96 MiB on v5e/v6e
    except Exception:
        pass
    dk = _device_kind()
    if "v7" in dk:
        return 48 * 1024 * 1024
    if "v5" in dk or "v6" in dk:
        return 96 * 1024 * 1024
    return 48 * 1024 * 1024                                # conservative default


def _softmax_exp_dtype():
    # v6e/v7x EUP has a bf16 path (~2x exp throughput); v5e does not.
    dk = _device_kind()
    if "v6" in dk or "v7" in dk:
        return jnp.bfloat16
    return jnp.float32


_VMEM_LIMIT = _vmem_limit_bytes()
_EXP_DTYPE = _softmax_exp_dtype()


def _pick_tile(dim, cap, quantum):
    """Largest multiple of `quantum` that is <= cap and divides `dim`;
    falls back to the full dim (legal: block == full array dim)."""
    t = (cap // quantum) * quantum
    while t >= quantum:
        if dim >= t and dim % t == 0:
            return t
        t -= quantum
    return dim


# ----------------------------------------------------------------------------
# Tiled linear kernels:  y = x @ W.T + b      (PyTorch F.linear semantics)
# ----------------------------------------------------------------------------
def _linear_kernel_f32(x_ref, w_ref, b_ref, o_ref):
    # x: (bm, bk) bf16, w: (bn, bk) bf16, b: (1, bn) f32, o: (bm, bn) f32.
    # o_ref doubles as the K accumulator: its block index does not depend on
    # the K grid axis, so it stays resident in VMEM across K steps.
    @pl.when(pl.program_id(2) == 0)
    def _():
        o_ref[...] = jnp.broadcast_to(b_ref[...], o_ref.shape)

    o_ref[...] += lax.dot_general(
        x_ref[...], w_ref[...],
        dimension_numbers=(((1,), (1,)), ((), ())),   # contract last-vs-last (W.T)
        preferred_element_type=jnp.float32,
    )


def _linear_kernel_lowp(x_ref, w_ref, b_ref, o_ref, acc_ref):
    # Same as above but with a bf16 (or other low-precision) output: keep an
    # f32 VMEM accumulator and cast only at the final store.
    @pl.when(pl.program_id(2) == 0)
    def _():
        acc_ref[...] = jnp.broadcast_to(b_ref[...], acc_ref.shape)

    acc_ref[...] += lax.dot_general(
        x_ref[...], w_ref[...],
        dimension_numbers=(((1,), (1,)), ((), ())),
        preferred_element_type=jnp.float32,
    )

    @pl.when(pl.program_id(2) == pl.num_programs(2) - 1)
    def _():
        o_ref[...] = acc_ref[...].astype(o_ref.dtype)


def pallas_linear(x, w, b, out_dtype=jnp.float32):
    """y = x @ w.T + b ; x: (M, K), w: (N, K), b: (N,) -> (M, N) `out_dtype`."""
    M, K = x.shape
    N = w.shape[0]
    # Stream bf16 operands (halves HBM traffic vs casting inside the kernel).
    x = x.astype(_MXU_DTYPE)
    w = w.astype(_MXU_DTYPE)
    b2 = b.astype(jnp.float32).reshape(1, N)

    bm = _pick_tile(M, 512, 8)       # second-minor: multiple of 8 (or full)
    bn = _pick_tile(N, 512, 128)     # lane dim of output: multiple of 128 (or full)
    bk = _pick_tile(K, 1024, 128)    # lane dim of x/w blocks: multiple of 128 (or full)
    grid = (M // bm, N // bn, K // bk)

    if jnp.dtype(out_dtype) == jnp.dtype(jnp.float32):
        kernel = _linear_kernel_f32
        scratch = []
    else:
        kernel = _linear_kernel_lowp
        scratch = [pltpu.VMEM((bm, bn), jnp.float32)]

    return pl.pallas_call(
        kernel,
        out_shape=jax.ShapeDtypeStruct((M, N), out_dtype),
        grid=grid,
        in_specs=[
            pl.BlockSpec((bm, bk), lambda i, j, k: (i, k)),
            pl.BlockSpec((bn, bk), lambda i, j, k: (j, k)),
            pl.BlockSpec((1, bn), lambda i, j, k: (0, j)),
        ],
        out_specs=pl.BlockSpec((bm, bn), lambda i, j, k: (i, j)),
        scratch_shapes=scratch,
        compiler_params=pltpu.CompilerParams(
            dimension_semantics=("parallel", "parallel", "arbitrary"),
            vmem_limit_bytes=_VMEM_LIMIT,
        ),
    )(x, w, b2)


# ----------------------------------------------------------------------------
# Attention kernel: per-batch block, all heads.
#   q: (bt, H, Hd) bf16, k/v: (S, H, Hd) bf16
#   o: (bt, E) bf16 (lane-dense), w: (bt, S) f32 head-averaged weights
# ----------------------------------------------------------------------------
def _mha_kernel(q_ref, k_ref, v_ref, o_ref, w_ref, *, scale, exp_dtype):
    H, Hd = q_ref.shape[1], q_ref.shape[2]
    scale_c = jnp.asarray(scale, dtype=q_ref.dtype)

    # The (bt, S) weights output block is resident for the whole grid step:
    # use it directly as the head accumulator (no vreg carry, no scratch).
    w_ref[...] = jnp.zeros_like(w_ref)

    # Static unroll over heads; every per-head temporary dies at the ref
    # stores below, so live ranges stay bounded per iteration.  Each q/k/v
    # element is touched exactly once (no redundant per-head casts: operands
    # are already bf16 in VMEM).
    for h in range(H):
        q = q_ref[:, h, :] * scale_c                         # (bt, Hd) bf16
        k = k_ref[:, h, :]                                   # (S, Hd)  bf16
        v = v_ref[:, h, :]                                   # (S, Hd)  bf16

        s = lax.dot_general(q, k, (((1,), (1,)), ((), ())),
                            preferred_element_type=jnp.float32)    # (bt, S) f32
        m = jnp.max(s, axis=-1, keepdims=True)
        p = jnp.exp((s - m).astype(exp_dtype))               # bf16 exp on v6e/v7x
        p32 = p.astype(jnp.float32)
        inv_l = pl.reciprocal(jnp.sum(p32, axis=-1, keepdims=True), approx=False)

        # Normalize after the PV matmul (scales (bt, Hd), not (bt, S)).
        o = lax.dot_general(p.astype(_MXU_DTYPE), v, (((1,), (0,)), ((), ())),
                            preferred_element_type=jnp.float32)    # (bt, Hd) f32
        o_ref[:, h * Hd:(h + 1) * Hd] = (o * inv_l).astype(o_ref.dtype)
        w_ref[...] += p32 * inv_l

    w_ref[...] *= (1.0 / H)                                  # head average


def pallas_sdpa(q5, k5, v5, qi, ki, vi):
    """q5: (T, B, Pq, H, Hd), k5/v5: (S, B, Pk, H, Hd) (bf16); qi/ki/vi select
    the projection slot (packed QKV) along the P axis.
    Returns out (B, T, E) bf16 and head-averaged attention weights (B, T, S) f32."""
    T, B, _, H, Hd = q5.shape
    S = k5.shape[0]
    E = H * Hd
    scale = 1.0 / math.sqrt(Hd)
    bt = _pick_tile(T, 256, 8)
    grid = (B, T // bt)   # NOTE: on v7x ensure B * (T // bt) >= 2 for megacore

    kernel = functools.partial(_mha_kernel, scale=scale, exp_dtype=_EXP_DTYPE)
    return pl.pallas_call(
        kernel,
        out_shape=(
            jax.ShapeDtypeStruct((B, T, E), _MXU_DTYPE),
            jax.ShapeDtypeStruct((B, T, S), jnp.float32),
        ),
        grid=grid,
        in_specs=[
            pl.BlockSpec((bt, pl.Squeezed(), pl.Squeezed(), H, Hd),
                         lambda b, ti, p=qi: (ti, b, p, 0, 0)),
            pl.BlockSpec((S, pl.Squeezed(), pl.Squeezed(), H, Hd),
                         lambda b, ti, p=ki: (0, b, p, 0, 0)),
            pl.BlockSpec((S, pl.Squeezed(), pl.Squeezed(), H, Hd),
                         lambda b, ti, p=vi: (0, b, p, 0, 0)),
        ],
        out_specs=(
            pl.BlockSpec((pl.Squeezed(), bt, E), lambda b, ti: (b, ti, 0)),
            pl.BlockSpec((pl.Squeezed(), bt, S), lambda b, ti: (b, ti, 0)),
        ),
        compiler_params=pltpu.CompilerParams(
            dimension_semantics=("parallel", "parallel"),
            vmem_limit_bytes=_VMEM_LIMIT,
        ),
    )(q5, k5, v5)


# ----------------------------------------------------------------------------
# MultiheadAttention forward (matches the PyTorch module with
# _qkv_same_embed_dim=True, bias=True, add_bias_kv=False, add_zero_attn=False,
# dropout=0.0, no masks, need_weights=True).
# ----------------------------------------------------------------------------
def multihead_attention(query, key, value, params, num_heads):
    tgt_len, bsz, E = query.shape
    src_len = key.shape[0]
    head_dim = E // num_heads

    Wqkv = params["in_proj_weight"]      # (3E, E)
    bqkv = params["in_proj_bias"]        # (3E,)
    Wo = params["out_proj_weight"]       # (E, E)
    bo = params["out_proj_bias"]         # (E,)

    if key is value:
        if query is key:
            # self-attention: single fused packed in-projection (Dout = 3E), bf16 out
            qkv = pallas_linear(query.reshape(tgt_len * bsz, E), Wqkv, bqkv,
                                out_dtype=_MXU_DTYPE)
            qkv5 = qkv.reshape(tgt_len, bsz, 3, num_heads, head_dim)   # free reshape
            q5 = k5 = v5 = qkv5
            qi, ki, vi = 0, 1, 2
        else:
            # encoder-decoder: q alone, packed kv (Dout = 2E)
            q_p = pallas_linear(query.reshape(tgt_len * bsz, E),
                                Wqkv[:E], bqkv[:E], out_dtype=_MXU_DTYPE)
            kv_p = pallas_linear(key.reshape(src_len * bsz, E),
                                 Wqkv[E:], bqkv[E:], out_dtype=_MXU_DTYPE)
            q5 = q_p.reshape(tgt_len, bsz, 1, num_heads, head_dim)
            kv5 = kv_p.reshape(src_len, bsz, 2, num_heads, head_dim)
            k5 = v5 = kv5
            qi, ki, vi = 0, 0, 1
    else:
        q_p = pallas_linear(query.reshape(tgt_len * bsz, E),
                            Wqkv[:E], bqkv[:E], out_dtype=_MXU_DTYPE)
        k_p = pallas_linear(key.reshape(src_len * bsz, E),
                            Wqkv[E:2 * E], bqkv[E:2 * E], out_dtype=_MXU_DTYPE)
        v_p = pallas_linear(value.reshape(src_len * bsz, E),
                            Wqkv[2 * E:], bqkv[2 * E:], out_dtype=_MXU_DTYPE)
        q5 = q_p.reshape(tgt_len, bsz, 1, num_heads, head_dim)
        k5 = k_p.reshape(src_len, bsz, 1, num_heads, head_dim)
        v5 = v_p.reshape(src_len, bsz, 1, num_heads, head_dim)
        qi = ki = vi = 0

    # attention: lane-dense (B, T, E) bf16 output + fused head-avg weights
    attn_out, attn_w = pallas_sdpa(q5, k5, v5, qi, ki, vi)
    # single cheap bf16 transpose back to seq-first; the (T*B, E) reshape and
    # the final (T, B, E) reshape are then free / contiguous.
    attn_seq = jnp.transpose(attn_out, (1, 0, 2))            # (T, B, E) bf16
    out = pallas_linear(attn_seq.reshape(tgt_len * bsz, E), Wo, bo,
                        out_dtype=jnp.float32)
    out = out.reshape(tgt_len, bsz, E)
    return out, attn_w


# ----------------------------------------------------------------------------
# deterministic parameter init (mirrors the module's _reset_parameters)
# ----------------------------------------------------------------------------
def init_params(key, embed_dim):
    k1, k2 = jax.random.split(key)
    E = embed_dim
    bound_in = math.sqrt(6.0 / (E + 3 * E))            # xavier_uniform_
    in_proj_weight = jax.random.uniform(
        k1, (3 * E, E), jnp.float32, -bound_in, bound_in)
    bound_out = 1.0 / math.sqrt(E)
    out_proj_weight = jax.random.uniform(
        k2, (E, E), jnp.float32, -bound_out, bound_out)
    return {
        "in_proj_weight": in_proj_weight,
        "in_proj_bias": jnp.zeros((3 * E,), jnp.float32),
        "out_proj_weight": out_proj_weight,
        "out_proj_bias": jnp.zeros((E,), jnp.float32),
    }


# pure-JAX f32 reference for a sanity check
def _reference(query, key, value, params, num_heads):
    tgt_len, bsz, E = query.shape
    src_len = key.shape[0]
    hd = E // num_heads
    Wqkv, bqkv = params["in_proj_weight"], params["in_proj_bias"]
    Wo, bo = params["out_proj_weight"], params["out_proj_bias"]
    q = query @ Wqkv[:E].T + bqkv[:E]
    k = key @ Wqkv[E:2 * E].T + bqkv[E:2 * E]
    v = value @ Wqkv[2 * E:].T + bqkv[2 * E:]
    q = q.reshape(tgt_len, bsz * num_heads, hd).transpose(1, 0, 2) / math.sqrt(hd)
    k = k.reshape(src_len, bsz * num_heads, hd).transpose(1, 0, 2)
    v = v.reshape(src_len, bsz * num_heads, hd).transpose(1, 0, 2)
    s = jnp.einsum("btd,bsd->bts", q, k)
    p = jax.nn.softmax(s, axis=-1)
    o = jnp.einsum("bts,bsd->btd", p, v)
    o = o.transpose(1, 0, 2).reshape(tgt_len, bsz, E)
    o = o @ Wo.T + bo
    w = p.reshape(bsz, num_heads, tgt_len, src_len).sum(1) / num_heads
    return o, w


if __name__ == "__main__":
    seq_len = 8        # tgt_len == src_len (self-attention)
    bsz = 2
    embed_dim = 32
    num_heads = 4

    root = jax.random.PRNGKey(0)
    kp, kq = jax.random.split(root)
    params = init_params(kp, embed_dim)
    x = jax.random.normal(kq, (seq_len, bsz, embed_dim), jnp.float32)

    # jit a self-attention wrapper (q is k is v inside -> fused packed path)
    mha_self = jax.jit(lambda x_, p_: multihead_attention(x_, x_, x_, p_, num_heads))
    out, attn_w = mha_self(x, params)
    out = jax.block_until_ready(out)
    attn_w = jax.block_until_ready(attn_w)

    ref_out, ref_w = _reference(x, x, x, params, num_heads)
    assert out.shape == (seq_len, bsz, embed_dim)
    assert out.dtype == jnp.float32
    assert attn_w.shape == (bsz, seq_len, seq_len)
    # tolerance relaxed vs. f32: MXU inputs / QKV storage are bf16 (f32 accum),
    # and exp may run in bf16 on v6e/v7x.
    assert jnp.allclose(out, ref_out, atol=2e-2, rtol=2e-2)
    assert jnp.allclose(attn_w, ref_w, atol=2e-2, rtol=2e-2)

    print("KERNEL_OK")
</pallas_src>

<mosaic_0001>
module attributes {stable_mosaic.version = 11 : i64} {
  func.func @_linear_kernel_lowp(%arg0: i32, %arg1: i32, %arg2: i32, %arg3: memref<16x32xbf16, #tpu.memory_space<vmem>>, %arg4: memref<96x32xbf16, #tpu.memory_space<vmem>>, %arg5: memref<1x96xf32, #tpu.memory_space<vmem>>, %arg6: memref<16x96xbf16, #tpu.memory_space<vmem>>, %arg7: memref<16x96xf32, #tpu.memory_space<vmem>>) attributes {dimension_semantics = [#tpu.dimension_semantics<parallel>, #tpu.dimension_semantics<parallel>, #tpu.dimension_semantics<arbitrary>], iteration_bounds = array<i64: 1, 1, 1>, scalar_prefetch = 0 : i64, scratch_operands = 1 : i64, tpu.core_type = #tpu.core_type<tc>, window_params = [{transform_indices = @transform_0, window_bounds = array<i64: 16, 32>}, {transform_indices = @transform_1, window_bounds = array<i64: 96, 32>}, {transform_indices = @transform_2, window_bounds = array<i64: 1, 96>}, {transform_indices = @transform_3, window_bounds = array<i64: 16, 96>}]} {
    %c0_i32 = arith.constant 0 : i32
    %0 = arith.cmpi eq, %arg2, %c0_i32 : i32
    %1 = arith.extui %0 : i1 to i32
    %c0_i32_0 = arith.constant 0 : i32
    %2 = arith.cmpi ne, %1, %c0_i32_0 : i32
    scf.if %2 {
      %c0_10 = arith.constant 0 : index
      %c0_11 = arith.constant 0 : index
      %12 = vector.load %arg5[%c0_10, %c0_11] : memref<1x96xf32, #tpu.memory_space<vmem>>, vector<1x96xf32>
      %13 = vector.shape_cast %12 : vector<1x96xf32> to vector<1x96xf32>
      %14 = vector.broadcast %13 : vector<1x96xf32> to vector<16x96xf32>
      %c0_12 = arith.constant 0 : index
      %c0_13 = arith.constant 0 : index
      %15 = vector.load %arg7[%c0_12, %c0_13] : memref<16x96xf32, #tpu.memory_space<vmem>>, vector<16x96xf32>
      tpu.vector_store %arg7[%c0_12, %c0_13], %14 {strides = array<i32>} : memref<16x96xf32, #tpu.memory_space<vmem>>, vector<16x96xf32>,
    } else {
    }
    %c0 = arith.constant 0 : index
    %c0_1 = arith.constant 0 : index
    %3 = vector.load %arg7[%c0, %c0_1] : memref<16x96xf32, #tpu.memory_space<vmem>>, vector<16x96xf32>
    %c0_2 = arith.constant 0 : index
    %c0_3 = arith.constant 0 : index
    %4 = vector.load %arg3[%c0_2, %c0_3] : memref<16x32xbf16, #tpu.memory_space<vmem>>, vector<16x32xbf16>
    %c0_4 = arith.constant 0 : index
    %c0_5 = arith.constant 0 : index
    %5 = vector.load %arg4[%c0_4, %c0_5] : memref<96x32xbf16, #tpu.memory_space<vmem>>, vector<96x32xbf16>
    %cst = arith.constant dense<0.000000e+00> : vector<16x96xf32>
    %6 = tpu.matmul %4, %5, %cst {dimension_numbers = #tpu.dot_dimension_numbers<[1], [1], [0], [0], [0, 0, 1, 0], [], []>} : vector<16x32xbf16>, vector<96x32xbf16>, vector<16x96xf32> -> vector<16x96xf32>
    %7 = arith.addf %3, %6 : vector<16x96xf32>
    %c0_6 = arith.constant 0 : index
    %c0_7 = arith.constant 0 : index
    %8 = vector.load %arg7[%c0_6, %c0_7] : memref<16x96xf32, #tpu.memory_space<vmem>>, vector<16x96xf32>
    tpu.vector_store %arg7[%c0_6, %c0_7], %7 {strides = array<i32>} : memref<16x96xf32, #tpu.memory_space<vmem>>, vector<16x96xf32>,
    %c0_i32_8 = arith.constant 0 : i32
    %9 = arith.cmpi eq, %arg2, %c0_i32_8 : i32
    %10 = arith.extui %9 : i1 to i32
    %c0_i32_9 = arith.constant 0 : i32
    %11 = arith.cmpi ne, %10, %c0_i32_9 : i32
    scf.if %11 {
      %c0_10 = arith.constant 0 : index
      %c0_11 = arith.constant 0 : index
      %12 = vector.load %arg7[%c0_10, %c0_11] : memref<16x96xf32, #tpu.memory_space<vmem>>, vector<16x96xf32>
      %13 = arith.truncf %12 : vector<16x96xf32> to vector<16x96xbf16>
      %c0_12 = arith.constant 0 : index
      %c0_13 = arith.constant 0 : index
      %14 = vector.load %arg6[%c0_12, %c0_13] : memref<16x96xbf16, #tpu.memory_space<vmem>>, vector<16x96xbf16>
      tpu.vector_store %arg6[%c0_12, %c0_13], %13 {strides = array<i32>} : memref<16x96xbf16, #tpu.memory_space<vmem>>, vector<16x96xbf16>,
    } else {
    }
    return
  }
  func.func @transform_0(%arg0: i32, %arg1: i32, %arg2: i32) -> (i32, i32) {
    %c0_i32 = arith.constant 0 : i32
    return %arg0, %arg2 : i32, i32
  }
  func.func @transform_1(%arg0: i32, %arg1: i32, %arg2: i32) -> (i32, i32) {
    %c0_i32 = arith.constant 0 : i32
    return %arg1, %arg2 : i32, i32
  }
  func.func @transform_2(%arg0: i32, %arg1: i32, %arg2: i32) -> (i32, i32) {
    %c0_i32 = arith.constant 0 : i32
    %c0_i32_0 = arith.constant 0 : i32
    return %c0_i32, %arg1 : i32, i32
  }
  func.func @transform_3(%arg0: i32, %arg1: i32, %arg2: i32) -> (i32, i32) {
    %c0_i32 = arith.constant 0 : i32
    return %arg0, %arg1 : i32, i32
  }
}

module attributes {stable_mosaic.version = 11 : i64} {
  func.func @_linear_kernel_f32(%arg0: i32, %arg1: i32, %arg2: i32, %arg3: memref<16x32xbf16, #tpu.memory_space<vmem>>, %arg4: memref<32x32xbf16, #tpu.memory_space<vmem>>, %arg5: memref<1x32xf32, #tpu.memory_space<vmem>>, %arg6: memref<16x32xf32, #tpu.memory_space<vmem>>) attributes {dimension_semantics = [#tpu.dimension_semantics<parallel>, #tpu.dimension_semantics<parallel>, #tpu.dimension_semantics<arbitrary>], iteration_bounds = array<i64: 1, 1, 1>, scalar_prefetch = 0 : i64, scratch_operands = 0 : i64, tpu.core_type = #tpu.core_type<tc>, window_params = [{transform_indices = @transform_0, window_bounds = array<i64: 16, 32>}, {transform_indices = @transform_1, window_bounds = array<i64: 32, 32>}, {transform_indices = @transform_2, window_bounds = array<i64: 1, 32>}, {transform_indices = @transform_3, window_bounds = array<i64: 16, 32>}]} {
    %c0_i32 = arith.constant 0 : i32
    %0 = arith.cmpi eq, %arg2, %c0_i32 : i32
    %1 = arith.extui %0 : i1 to i32
    %c0_i32_0 = arith.constant 0 : i32
    %2 = arith.cmpi ne, %1, %c0_i32_0 : i32
    scf.if %2 {
      %c0_8 = arith.constant 0 : index
      %c0_9 = arith.constant 0 : index
      %9 = vector.load %arg5[%c0_8, %c0_9] : memref<1x32xf32, #tpu.memory_space<vmem>>, vector<1x32xf32>
      %10 = vector.shape_cast %9 : vector<1x32xf32> to vector<1x32xf32>
      %11 = vector.broadcast %10 : vector<1x32xf32> to vector<16x32xf32>
      %c0_10 = arith.constant 0 : index
      %c0_11 = arith.constant 0 : index
      %12 = vector.load %arg6[%c0_10, %c0_11] : memref<16x32xf32, #tpu.memory_space<vmem>>, vector<16x32xf32>
      tpu.vector_store %arg6[%c0_10, %c0_11], %11 {strides = array<i32>} : memref<16x32xf32, #tpu.memory_space<vmem>>, vector<16x32xf32>,
    } else {
    }
    %c0 = arith.constant 0 : index
    %c0_1 = arith.constant 0 : index
    %3 = vector.load %arg6[%c0, %c0_1] : memref<16x32xf32, #tpu.memory_space<vmem>>, vector<16x32xf32>
    %c0_2 = arith.constant 0 : index
    %c0_3 = arith.constant 0 : index
    %4 = vector.load %arg3[%c0_2, %c0_3] : memref<16x32xbf16, #tpu.memory_space<vmem>>, vector<16x32xbf16>
    %c0_4 = arith.constant 0 : index
    %c0_5 = arith.constant 0 : index
    %5 = vector.load %arg4[%c0_4, %c0_5] : memref<32x32xbf16, #tpu.memory_space<vmem>>, vector<32x32xbf16>
    %cst = arith.constant dense<0.000000e+00> : vector<16x32xf32>
    %6 = tpu.matmul %4, %5, %cst {dimension_numbers = #tpu.dot_dimension_numbers<[1], [1], [0], [0], [0, 0, 1, 0], [], []>} : vector<16x32xbf16>, vector<32x32xbf16>, vector<16x32xf32> -> vector<16x32xf32>
    %7 = arith.addf %3, %6 : vector<16x32xf32>
    %c0_6 = arith.constant 0 : index
    %c0_7 = arith.constant 0 : index
    %8 = vector.load %arg6[%c0_6, %c0_7] : memref<16x32xf32, #tpu.memory_space<vmem>>, vector<16x32xf32>
    tpu.vector_store %arg6[%c0_6, %c0_7], %7 {strides = array<i32>} : memref<16x32xf32, #tpu.memory_space<vmem>>, vector<16x32xf32>,
    return
  }
  func.func @transform_0(%arg0: i32, %arg1: i32, %arg2: i32) -> (i32, i32) {
    %c0_i32 = arith.constant 0 : i32
    return %arg0, %arg2 : i32, i32
  }
  func.func @transform_1(%arg0: i32, %arg1: i32, %arg2: i32) -> (i32, i32) {
    %c0_i32 = arith.constant 0 : i32
    return %arg1, %arg2 : i32, i32
  }
  func.func @transform_2(%arg0: i32, %arg1: i32, %arg2: i32) -> (i32, i32) {
    %c0_i32 = arith.constant 0 : i32
    %c0_i32_0 = arith.constant 0 : i32
    return %c0_i32, %arg1 : i32, i32
  }
  func.func @transform_3(%arg0: i32, %arg1: i32, %arg2: i32) -> (i32, i32) {
    %c0_i32 = arith.constant 0 : i32
    return %arg0, %arg1 : i32, i32
  }
}

module attributes {stable_mosaic.version = 11 : i64} {
  func.func @_mha_kernel(%arg0: i32, %arg1: i32, %arg2: memref<8x1x1x4x8xbf16, #tpu.memory_space<vmem>>, %arg3: memref<8x1x1x4x8xbf16, #tpu.memory_space<vmem>>, %arg4: memref<8x1x1x4x8xbf16, #tpu.memory_space<vmem>>, %arg5: memref<1x8x32xbf16, #tpu.memory_space<vmem>>, %arg6: memref<1x8x8xf32, #tpu.memory_space<vmem>>) attributes {dimension_semantics = [#tpu.dimension_semantics<parallel>, #tpu.dimension_semantics<parallel>], iteration_bounds = array<i64: 2, 1>, scalar_prefetch = 0 : i64, scratch_operands = 0 : i64, tpu.core_type = #tpu.core_type<tc>, window_params = [{transform_indices = @transform_0, window_bounds = array<i64: 8, 1, 1, 4, 8>}, {transform_indices = @transform_1, window_bounds = array<i64: 8, 1, 1, 4, 8>}, {transform_indices = @transform_2, window_bounds = array<i64: 8, 1, 1, 4, 8>}, {transform_indices = @transform_3, window_bounds = array<i64: 1, 8, 32>}, {transform_indices = @transform_4, window_bounds = array<i64: 1, 8, 8>}]} {
    %cst = arith.constant 0.000000e+00 : f32
    %0 = vector.broadcast %cst : f32 to vector<8x8xf32>
    %c0 = arith.constant 0 : index
    %c0_0 = arith.constant 0 : index
    %c0_1 = arith.constant 0 : index
    %1 = vector.load %arg6[%c0, %c0_0, %c0_1] : memref<1x8x8xf32, #tpu.memory_space<vmem>>, vector<1x8x8xf32>
    %2 = vector.shape_cast %1 : vector<1x8x8xf32> to vector<8x8xf32>
    %3 = vector.shape_cast %0 : vector<8x8xf32> to vector<1x8x8xf32>
    tpu.vector_store %arg6[%c0, %c0_0, %c0_1], %3 {strides = array<i32>} : memref<1x8x8xf32, #tpu.memory_space<vmem>>, vector<1x8x8xf32>,
    %c0_2 = arith.constant 0 : index
    %c0_3 = arith.constant 0 : index
    %c0_4 = arith.constant 0 : index
    %c0_5 = arith.constant 0 : index
    %c0_6 = arith.constant 0 : index
    %4 = vector.load %arg2[%c0_2, %c0_3, %c0_4, %c0_5, %c0_6] : memref<8x1x1x4x8xbf16, #tpu.memory_space<vmem>>, vector<8x1x1x1x8xbf16>
    %5 = vector.shape_cast %4 : vector<8x1x1x1x8xbf16> to vector<8x8xbf16>
    %cst_7 = arith.constant 3.535160e-01 : bf16
    %6 = vector.broadcast %cst_7 : bf16 to vector<8x8xbf16>
    %7 = arith.mulf %5, %6 : vector<8x8xbf16>
    %c0_8 = arith.constant 0 : index
    %c0_9 = arith.constant 0 : index
    %c0_10 = arith.constant 0 : index
    %c0_11 = arith.constant 0 : index
    %c0_12 = arith.constant 0 : index
    %8 = vector.load %arg3[%c0_8, %c0_9, %c0_10, %c0_11, %c0_12] : memref<8x1x1x4x8xbf16, #tpu.memory_space<vmem>>, vector<8x1x1x1x8xbf16>
    %9 = vector.shape_cast %8 : vector<8x1x1x1x8xbf16> to vector<8x8xbf16>
    %c0_13 = arith.constant 0 : index
    %c0_14 = arith.constant 0 : index
    %c0_15 = arith.constant 0 : index
    %c0_16 = arith.constant 0 : index
    %c0_17 = arith.constant 0 : index
    %10 = vector.load %arg4[%c0_13, %c0_14, %c0_15, %c0_16, %c0_17] : memref<8x1x1x4x8xbf16, #tpu.memory_space<vmem>>, vector<8x1x1x1x8xbf16>
    %11 = vector.shape_cast %10 : vector<8x1x1x1x8xbf16> to vector<8x8xbf16>
    %cst_18 = arith.constant dense<0.000000e+00> : vector<8x8xf32>
    %12 = tpu.matmul %7, %9, %cst_18 {dimension_numbers = #tpu.dot_dimension_numbers<[1], [1], [0], [0], [0, 0, 1, 0], [], []>} : vector<8x8xbf16>, vector<8x8xbf16>, vector<8x8xf32> -> vector<8x8xf32>
    %cst_19 = arith.constant dense<0xFF800000> : vector<8xf32>
    %13 = vector.multi_reduction <maximumf>, %12, %cst_19 [1] : vector<8x8xf32> to vector<8xf32>
    %14 = vector.shape_cast %13 : vector<8xf32> to vector<8x1xf32>
    %15 = vector.broadcast %14 : vector<8x1xf32> to vector<8x8xf32>
    %16 = arith.subf %12, %15 : vector<8x8xf32>
    %17 = math.exp %16 : vector<8x8xf32>
    %cst_20 = arith.constant dense<0.000000e+00> : vector<8xf32>
    %18 = vector.multi_reduction <add>, %17, %cst_20 [1] : vector<8x8xf32> to vector<8xf32>
    %19 = vector.shape_cast %18 : vector<8xf32> to vector<8x1xf32>
    %20 = tpu.reciprocal %19 : vector<8x1xf32> -> vector<8x1xf32>
    %21 = arith.truncf %17 : vector<8x8xf32> to vector<8x8xbf16>
    %cst_21 = arith.constant dense<0.000000e+00> : vector<8x8xf32>
    %22 = tpu.matmul %21, %11, %cst_21 {dimension_numbers = #tpu.dot_dimension_numbers<[1], [0], [0], [1], [0, 0, 1, 1], [], []>} : vector<8x8xbf16>, vector<8x8xbf16>, vector<8x8xf32> -> vector<8x8xf32>
    %23 = vector.broadcast %20 : vector<8x1xf32> to vector<8x8xf32>
    %24 = arith.mulf %22, %23 : vector<8x8xf32>
    %25 = arith.truncf %24 : vector<8x8xf32> to vector<8x8xbf16>
    %c0_22 = arith.constant 0 : index
    %c0_23 = arith.constant 0 : index
    %c0_24 = arith.constant 0 : index
    %26 = vector.load %arg5[%c0_22, %c0_23, %c0_24] : memref<1x8x32xbf16, #tpu.memory_space<vmem>>, vector<1x8x8xbf16>
    %27 = vector.shape_cast %26 : vector<1x8x8xbf16> to vector<8x8xbf16>
    %28 = vector.shape_cast %25 : vector<8x8xbf16> to vector<1x8x8xbf16>
    tpu.vector_store %arg5[%c0_22, %c0_23, %c0_24], %28 {strides = array<i32>} : memref<1x8x32xbf16, #tpu.memory_space<vmem>>, vector<1x8x8xbf16>,
    %c0_25 = arith.constant 0 : index
    %c0_26 = arith.constant 0 : index
    %c0_27 = arith.constant 0 : index
    %29 = vector.load %arg6[%c0_25, %c0_26, %c0_27] : memref<1x8x8xf32, #tpu.memory_space<vmem>>, vector<1x8x8xf32>
    %30 = vector.shape_cast %29 : vector<1x8x8xf32> to vector<8x8xf32>
    %31 = vector.broadcast %20 : vector<8x1xf32> to vector<8x8xf32>
    %32 = arith.mulf %17, %31 : vector<8x8xf32>
    %33 = arith.addf %30, %32 : vector<8x8xf32>
    %c0_28 = arith.constant 0 : index
    %c0_29 = arith.constant 0 : index
    %c0_30 = arith.constant 0 : index
    %34 = vector.load %arg6[%c0_28, %c0_29, %c0_30] : memref<1x8x8xf32, #tpu.memory_space<vmem>>, vector<1x8x8xf32>
    %35 = vector.shape_cast %34 : vector<1x8x8xf32> to vector<8x8xf32>
    %36 = vector.shape_cast %33 : vector<8x8xf32> to vector<1x8x8xf32>
    tpu.vector_store %arg6[%c0_28, %c0_29, %c0_30], %36 {strides = array<i32>} : memref<1x8x8xf32, #tpu.memory_space<vmem>>, vector<1x8x8xf32>,
    %c0_31 = arith.constant 0 : index
    %c0_32 = arith.constant 0 : index
    %c0_33 = arith.constant 0 : index
    %c1 = arith.constant 1 : index
    %c0_34 = arith.constant 0 : index
    %37 = vector.load %arg2[%c0_31, %c0_32, %c0_33, %c1, %c0_34] : memref<8x1x1x4x8xbf16, #tpu.memory_space<vmem>>, vector<8x1x1x1x8xbf16>
    %38 = vector.shape_cast %37 : vector<8x1x1x1x8xbf16> to vector<8x8xbf16>
    %cst_35 = arith.constant 3.535160e-01 : bf16
    %39 = vector.broadcast %cst_35 : bf16 to vector<8x8xbf16>
    %40 = arith.mulf %38, %39 : vector<8x8xbf16>
    %c0_36 = arith.constant 0 : index
    %c0_37 = arith.constant 0 : index
    %c0_38 = arith.constant 0 : index
    %c1_39 = arith.constant 1 : index
    %c0_40 = arith.constant 0 : index
    %41 = vector.load %arg3[%c0_36, %c0_37, %c0_38, %c1_39, %c0_40] : memref<8x1x1x4x8xbf16, #tpu.memory_space<vmem>>, vector<8x1x1x1x8xbf16>
    %42 = vector.shape_cast %41 : vector<8x1x1x1x8xbf16> to vector<8x8xbf16>
    %c0_41 = arith.constant 0 : index
    %c0_42 = arith.constant 0 : index
    %c0_43 = arith.constant 0 : index
    %c1_44 = arith.constant 1 : index
    %c0_45 = arith.constant 0 : index
    %43 = vector.load %arg4[%c0_41, %c0_42, %c0_43, %c1_44, %c0_45] : memref<8x1x1x4x8xbf16, #tpu.memory_space<vmem>>, vector<8x1x1x1x8xbf16>
    %44 = vector.shape_cast %43 : vector<8x1x1x1x8xbf16> to vector<8x8xbf16>
    %cst_46 = arith.constant dense<0.000000e+00> : vector<8x8xf32>
    %45 = tpu.matmul %40, %42, %cst_46 {dimension_numbers = #tpu.dot_dimension_numbers<[1], [1], [0], [0], [0, 0, 1, 0], [], []>} : vector<8x8xbf16>, vector<8x8xbf16>, vector<8x8xf32> -> vector<8x8xf32>
    %cst_47 = arith.constant dense<0xFF800000> : vector<8xf32>
    %46 = vector.multi_reduction <maximumf>, %45, %cst_47 [1] : vector<8x8xf32> to vector<8xf32>
    %47 = vector.shape_cast %46 : vector<8xf32> to vector<8x1xf32>
    %48 = vector.broadcast %47 : vector<8x1xf32> to vector<8x8xf32>
    %49 = arith.subf %45, %48 : vector<8x8xf32>
    %50 = math.exp %49 : vector<8x8xf32>
    %cst_48 = arith.constant dense<0.000000e+00> : vector<8xf32>
    %51 = vector.multi_reduction <add>, %50, %cst_48 [1] : vector<8x8xf32> to vector<8xf32>
    %52 = vector.shape_cast %51 : vector<8xf32> to vector<8x1xf32>
    %53 = tpu.reciprocal %52 : vector<8x1xf32> -> vector<8x1xf32>
    %54 = arith.truncf %50 : vector<8x8xf32> to vector<8x8xbf16>
    %cst_49 = arith.constant dense<0.000000e+00> : vector<8x8xf32>
    %55 = tpu.matmul %54, %44, %cst_49 {dimension_numbers = #tpu.dot_dimension_numbers<[1], [0], [0], [1], [0, 0, 1, 1], [], []>} : vector<8x8xbf16>, vector<8x8xbf16>, vector<8x8xf32> -> vector<8x8xf32>
    %56 = vector.broadcast %53 : vector<8x1xf32> to vector<8x8xf32>
    %57 = arith.mulf %55, %56 : vector<8x8xf32>
    %58 = arith.truncf %57 : vector<8x8xf32> to vector<8x8xbf16>
    %c0_50 = arith.constant 0 : index
    %c0_51 = arith.constant 0 : index
    %c8 = arith.constant 8 : index
    %59 = vector.load %arg5[%c0_50, %c0_51, %c8] : memref<1x8x32xbf16, #tpu.memory_space<vmem>>, vector<1x8x8xbf16>
    %60 = vector.shape_cast %59 : vector<1x8x8xbf16> to vector<8x8xbf16>
    %61 = vector.shape_cast %58 : vector<8x8xbf16> to vector<1x8x8xbf16>
    tpu.vector_store %arg5[%c0_50, %c0_51, %c8], %61 {strides = array<i32>} : memref<1x8x32xbf16, #tpu.memory_space<vmem>>, vector<1x8x8xbf16>,
    %c0_52 = arith.constant 0 : index
    %c0_53 = arith.constant 0 : index
    %c0_54 = arith.constant 0 : index
    %62 = vector.load %arg6[%c0_52, %c0_53, %c0_54] : memref<1x8x8xf32, #tpu.memory_space<vmem>>, vector<1x8x8xf32>
    %63 = vector.shape_cast %62 : vector<1x8x8xf32> to vector<8x8xf32>
    %64 = vector.broadcast %53 : vector<8x1xf32> to vector<8x8xf32>
    %65 = arith.mulf %50, %64 : vector<8x8xf32>
    %66 = arith.addf %63, %65 : vector<8x8xf32>
    %c0_55 = arith.constant 0 : index
    %c0_56 = arith.constant 0 : index
    %c0_57 = arith.constant 0 : index
    %67 = vector.load %arg6[%c0_55, %c0_56, %c0_57] : memref<1x8x8xf32, #tpu.memory_space<vmem>>, vector<1x8x8xf32>
    %68 = vector.shape_cast %67 : vector<1x8x8xf32> to vector<8x8xf32>
    %69 = vector.shape_cast %66 : vector<8x8xf32> to vector<1x8x8xf32>
    tpu.vector_store %arg6[%c0_55, %c0_56, %c0_57], %69 {strides = array<i32>} : memref<1x8x8xf32, #tpu.memory_space<vmem>>, vector<1x8x8xf32>,
    %c0_58 = arith.constant 0 : index
    %c0_59 = arith.constant 0 : index
    %c0_60 = arith.constant 0 : index
    %c2 = arith.constant 2 : index
    %c0_61 = arith.constant 0 : index
    %70 = vector.load %arg2[%c0_58, %c0_59, %c0_60, %c2, %c0_61] : memref<8x1x1x4x8xbf16, #tpu.memory_space<vmem>>, vector<8x1x1x1x8xbf16>
    %71 = vector.shape_cast %70 : vector<8x1x1x1x8xbf16> to vector<8x8xbf16>
    %cst_62 = arith.constant 3.535160e-01 : bf16
    %72 = vector.broadcast %cst_62 : bf16 to vector<8x8xbf16>
    %73 = arith.mulf %71, %72 : vector<8x8xbf16>
    %c0_63 = arith.constant 0 : index
    %c0_64 = arith.constant 0 : index
    %c0_65 = arith.constant 0 : index
    %c2_66 = arith.constant 2 : index
    %c0_67 = arith.constant 0 : index
    %74 = vector.load %arg3[%c0_63, %c0_64, %c0_65, %c2_66, %c0_67] : memref<8x1x1x4x8xbf16, #tpu.memory_space<vmem>>, vector<8x1x1x1x8xbf16>
    %75 = vector.shape_cast %74 : vector<8x1x1x1x8xbf16> to vector<8x8xbf16>
    %c0_68 = arith.constant 0 : index
    %c0_69 = arith.constant 0 : index
    %c0_70 = arith.constant 0 : index
    %c2_71 = arith.constant 2 : index
    %c0_72 = arith.constant 0 : index
    %76 = vector.load %arg4[%c0_68, %c0_69, %c0_70, %c2_71, %c0_72] : memref<8x1x1x4x8xbf16, #tpu.memory_space<vmem>>, vector<8x1x1x1x8xbf16>
    %77 = vector.shape_cast %76 : vector<8x1x1x1x8xbf16> to vector<8x8xbf16>
    %cst_73 = arith.constant dense<0.000000e+00> : vector<8x8xf32>
    %78 = tpu.matmul %73, %75, %cst_73 {dimension_numbers = #tpu.dot_dimension_numbers<[1], [1], [0], [0], [0, 0, 1, 0], [], []>} : vector<8x8xbf16>, vector<8x8xbf16>, vector<8x8xf32> -> vector<8x8xf32>
    %cst_74 = arith.constant dense<0xFF800000> : vector<8xf32>
    %79 = vector.multi_reduction <maximumf>, %78, %cst_74 [1] : vector<8x8xf32> to vector<8xf32>
    %80 = vector.shape_cast %79 : vector<8xf32> to vector<8x1xf32>
    %81 = vector.broadcast %80 : vector<8x1xf32> to vector<8x8xf32>
    %82 = arith.subf %78, %81 : vector<8x8xf32>
    %83 = math.exp %82 : vector<8x8xf32>
    %cst_75 = arith.constant dense<0.000000e+00> : vector<8xf32>
    %84 = vector.multi_reduction <add>, %83, %cst_75 [1] : vector<8x8xf32> to vector<8xf32>
    %85 = vector.shape_cast %84 : vector<8xf32> to vector<8x1xf32>
    %86 = tpu.reciprocal %85 : vector<8x1xf32> -> vector<8x1xf32>
    %87 = arith.truncf %83 : vector<8x8xf32> to vector<8x8xbf16>
    %cst_76 = arith.constant dense<0.000000e+00> : vector<8x8xf32>
    %88 = tpu.matmul %87, %77, %cst_76 {dimension_numbers = #tpu.dot_dimension_numbers<[1], [0], [0], [1], [0, 0, 1, 1], [], []>} : vector<8x8xbf16>, vector<8x8xbf16>, vector<8x8xf32> -> vector<8x8xf32>
    %89 = vector.broadcast %86 : vector<8x1xf32> to vector<8x8xf32>
    %90 = arith.mulf %88, %89 : vector<8x8xf32>
    %91 = arith.truncf %90 : vector<8x8xf32> to vector<8x8xbf16>
    %c0_77 = arith.constant 0 : index
    %c0_78 = arith.constant 0 : index
    %c16 = arith.constant 16 : index
    %92 = vector.load %arg5[%c0_77, %c0_78, %c16] : memref<1x8x32xbf16, #tpu.memory_space<vmem>>, vector<1x8x8xbf16>
    %93 = vector.shape_cast %92 : vector<1x8x8xbf16> to vector<8x8xbf16>
    %94 = vector.shape_cast %91 : vector<8x8xbf16> to vector<1x8x8xbf16>
    tpu.vector_store %arg5[%c0_77, %c0_78, %c16], %94 {strides = array<i32>} : memref<1x8x32xbf16, #tpu.memory_space<vmem>>, vector<1x8x8xbf16>,
    %c0_79 = arith.constant 0 : index
    %c0_80 = arith.constant 0 : index
    %c0_81 = arith.constant 0 : index
    %95 = vector.load %arg6[%c0_79, %c0_80, %c0_81] : memref<1x8x8xf32, #tpu.memory_space<vmem>>, vector<1x8x8xf32>
    %96 = vector.shape_cast %95 : vector<1x8x8xf32> to vector<8x8xf32>
    %97 = vector.broadcast %86 : vector<8x1xf32> to vector<8x8xf32>
    %98 = arith.mulf %83, %97 : vector<8x8xf32>
    %99 = arith.addf %96, %98 : vector<8x8xf32>
    %c0_82 = arith.constant 0 : index
    %c0_83 = arith.constant 0 : index
    %c0_84 = arith.constant 0 : index
    %100 = vector.load %arg6[%c0_82, %c0_83, %c0_84] : memref<1x8x8xf32, #tpu.memory_space<vmem>>, vector<1x8x8xf32>
    %101 = vector.shape_cast %100 : vector<1x8x8xf32> to vector<8x8xf32>
    %102 = vector.shape_cast %99 : vector<8x8xf32> to vector<1x8x8xf32>
    tpu.vector_store %arg6[%c0_82, %c0_83, %c0_84], %102 {strides = array<i32>} : memref<1x8x8xf32, #tpu.memory_space<vmem>>, vector<1x8x8xf32>,
    %c0_85 = arith.constant 0 : index
    %c0_86 = arith.constant 0 : index
    %c0_87 = arith.constant 0 : index
    %c3 = arith.constant 3 : index
    %c0_88 = arith.constant 0 : index
    %103 = vector.load %arg2[%c0_85, %c0_86, %c0_87, %c3, %c0_88] : memref<8x1x1x4x8xbf16, #tpu.memory_space<vmem>>, vector<8x1x1x1x8xbf16>
    %104 = vector.shape_cast %103 : vector<8x1x1x1x8xbf16> to vector<8x8xbf16>
    %cst_89 = arith.constant 3.535160e-01 : bf16
    %105 = vector.broadcast %cst_89 : bf16 to vector<8x8xbf16>
    %106 = arith.mulf %104, %105 : vector<8x8xbf16>
    %c0_90 = arith.constant 0 : index
    %c0_91 = arith.constant 0 : index
    %c0_92 = arith.constant 0 : index
    %c3_93 = arith.constant 3 : index
    %c0_94 = arith.constant 0 : index
    %107 = vector.load %arg3[%c0_90, %c0_91, %c0_92, %c3_93, %c0_94] : memref<8x1x1x4x8xbf16, #tpu.memory_space<vmem>>, vector<8x1x1x1x8xbf16>
    %108 = vector.shape_cast %107 : vector<8x1x1x1x8xbf16> to vector<8x8xbf16>
    %c0_95 = arith.constant 0 : index
    %c0_96 = arith.constant 0 : index
    %c0_97 = arith.constant 0 : index
    %c3_98 = arith.constant 3 : index
    %c0_99 = arith.constant 0 : index
    %109 = vector.load %arg4[%c0_95, %c0_96, %c0_97, %c3_98, %c0_99] : memref<8x1x1x4x8xbf16, #tpu.memory_space<vmem>>, vector<8x1x1x1x8xbf16>
    %110 = vector.shape_cast %109 : vector<8x1x1x1x8xbf16> to vector<8x8xbf16>
    %cst_100 = arith.constant dense<0.000000e+00> : vector<8x8xf32>
    %111 = tpu.matmul %106, %108, %cst_100 {dimension_numbers = #tpu.dot_dimension_numbers<[1], [1], [0], [0], [0, 0, 1, 0], [], []>} : vector<8x8xbf16>, vector<8x8xbf16>, vector<8x8xf32> -> vector<8x8xf32>
    %cst_101 = arith.constant dense<0xFF800000> : vector<8xf32>
    %112 = vector.multi_reduction <maximumf>, %111, %cst_101 [1] : vector<8x8xf32> to vector<8xf32>
    %113 = vector.shape_cast %112 : vector<8xf32> to vector<8x1xf32>
    %114 = vector.broadcast %113 : vector<8x1xf32> to vector<8x8xf32>
    %115 = arith.subf %111, %114 : vector<8x8xf32>
    %116 = math.exp %115 : vector<8x8xf32>
    %cst_102 = arith.constant dense<0.000000e+00> : vector<8xf32>
    %117 = vector.multi_reduction <add>, %116, %cst_102 [1] : vector<8x8xf32> to vector<8xf32>
    %118 = vector.shape_cast %117 : vector<8xf32> to vector<8x1xf32>
    %119 = tpu.reciprocal %118 : vector<8x1xf32> -> vector<8x1xf32>
    %120 = arith.truncf %116 : vector<8x8xf32> to vector<8x8xbf16>
    %cst_103 = arith.constant dense<0.000000e+00> : vector<8x8xf32>
    %121 = tpu.matmul %120, %110, %cst_103 {dimension_numbers = #tpu.dot_dimension_numbers<[1], [0], [0], [1], [0, 0, 1, 1], [], []>} : vector<8x8xbf16>, vector<8x8xbf16>, vector<8x8xf32> -> vector<8x8xf32>
    %122 = vector.broadcast %119 : vector<8x1xf32> to vector<8x8xf32>
    %123 = arith.mulf %121, %122 : vector<8x8xf32>
    %124 = arith.truncf %123 : vector<8x8xf32> to vector<8x8xbf16>
    %c0_104 = arith.constant 0 : index
    %c0_105 = arith.constant 0 : index
    %c24 = arith.constant 24 : index
    %125 = vector.load %arg5[%c0_104, %c0_105, %c24] : memref<1x8x32xbf16, #tpu.memory_space<vmem>>, vector<1x8x8xbf16>
    %126 = vector.shape_cast %125 : vector<1x8x8xbf16> to vector<8x8xbf16>
    %127 = vector.shape_cast %124 : vector<8x8xbf16> to vector<1x8x8xbf16>
    tpu.vector_store %arg5[%c0_104, %c0_105, %c24], %127 {strides = array<i32>} : memref<1x8x32xbf16, #tpu.memory_space<vmem>>, vector<1x8x8xbf16>,
    %c0_106 = arith.constant 0 : index
    %c0_107 = arith.constant 0 : index
    %c0_108 = arith.constant 0 : index
    %128 = vector.load %arg6[%c0_106, %c0_107, %c0_108] : memref<1x8x8xf32, #tpu.memory_space<vmem>>, vector<1x8x8xf32>
    %129 = vector.shape_cast %128 : vector<1x8x8xf32> to vector<8x8xf32>
    %130 = vector.broadcast %119 : vector<8x1xf32> to vector<8x8xf32>
    %131 = arith.mulf %116, %130 : vector<8x8xf32>
    %132 = arith.addf %129, %131 : vector<8x8xf32>
    %c0_109 = arith.constant 0 : index
    %c0_110 = arith.constant 0 : index
    %c0_111 = arith.constant 0 : index
    %133 = vector.load %arg6[%c0_109, %c0_110, %c0_111] : memref<1x8x8xf32, #tpu.memory_space<vmem>>, vector<1x8x8xf32>
    %134 = vector.shape_cast %133 : vector<1x8x8xf32> to vector<8x8xf32>
    %135 = vector.shape_cast %132 : vector<8x8xf32> to vector<1x8x8xf32>
    tpu.vector_store %arg6[%c0_109, %c0_110, %c0_111], %135 {strides = array<i32>} : memref<1x8x8xf32, #tpu.memory_space<vmem>>, vector<1x8x8xf32>,
    %c0_112 = arith.constant 0 : index
    %c0_113 = arith.constant 0 : index
    %c0_114 = arith.constant 0 : index
    %136 = vector.load %arg6[%c0_112, %c0_113, %c0_114] : memref<1x8x8xf32, #tpu.memory_space<vmem>>, vector<1x8x8xf32>
    %137 = vector.shape_cast %136 : vector<1x8x8xf32> to vector<8x8xf32>
    %cst_115 = arith.constant 2.500000e-01 : f32
    %138 = vector.broadcast %cst_115 : f32 to vector<8x8xf32>
    %139 = arith.mulf %137, %138 : vector<8x8xf32>
    %c0_116 = arith.constant 0 : index
    %c0_117 = arith.constant 0 : index
    %c0_118 = arith.constant 0 : index
    %140 = vector.load %arg6[%c0_116, %c0_117, %c0_118] : memref<1x8x8xf32, #tpu.memory_space<vmem>>, vector<1x8x8xf32>
    %141 = vector.shape_cast %140 : vector<1x8x8xf32> to vector<8x8xf32>
    %142 = vector.shape_cast %139 : vector<8x8xf32> to vector<1x8x8xf32>
    tpu.vector_store %arg6[%c0_116, %c0_117, %c0_118], %142 {strides = array<i32>} : memref<1x8x8xf32, #tpu.memory_space<vmem>>, vector<1x8x8xf32>,
    return
  }
  func.func @transform_0(%arg0: i32, %arg1: i32) -> (i32, i32, i32, i32, i32) {
    %c0_i32 = arith.constant 0 : i32
    %c0_i32_0 = arith.constant 0 : i32
    %c0_i32_1 = arith.constant 0 : i32
    %c0_i32_2 = arith.constant 0 : i32
    return %arg1, %arg0, %c0_i32, %c0_i32_0, %c0_i32_1 : i32, i32, i32, i32, i32
  }
  func.func @transform_1(%arg0: i32, %arg1: i32) -> (i32, i32, i32, i32, i32) {
    %c0_i32 = arith.constant 0 : i32
    %c1_i32 = arith.constant 1 : i32
    %c0_i32_0 = arith.constant 0 : i32
    %c0_i32_1 = arith.constant 0 : i32
    %c0_i32_2 = arith.constant 0 : i32
    return %c0_i32, %arg0, %c1_i32, %c0_i32_0, %c0_i32_1 : i32, i32, i32, i32, i32
  }
  func.func @transform_2(%arg0: i32, %arg1: i32) -> (i32, i32, i32, i32, i32) {
    %c0_i32 = arith.constant 0 : i32
    %c2_i32 = arith.constant 2 : i32
    %c0_i32_0 = arith.constant 0 : i32
    %c0_i32_1 = arith.constant 0 : i32
    %c0_i32_2 = arith.constant 0 : i32
    return %c0_i32, %arg0, %c2_i32, %c0_i32_0, %c0_i32_1 : i32, i32, i32, i32, i32
  }
  func.func @transform_3(%arg0: i32, %arg1: i32) -> (i32, i32, i32) {
    %c0_i32 = arith.constant 0 : i32
    %c0_i32_0 = arith.constant 0 : i32
    return %arg0, %arg1, %c0_i32 : i32, i32, i32
  }
  func.func @transform_4(%arg0: i32, %arg1: i32) -> (i32, i32, i32) {
    %c0_i32 = arith.constant 0 : i32
    %c0_i32_0 = arith.constant 0 : i32
    return %arg0, %arg1, %c0_i32 : i32, i32, i32
  }
}

</mosaic_0001>

<llo_original>
// kernel: _lambda_.3
$region0: #{_lambda_.3}
  #allocation0 [shape = 'u32[]', space=smem, size = 0x4, offset = 0x4, fixed_abs, tag = 'smem constant byte address 0x4 - core index']
  #allocation1 [shape = 'u32[144,128]{1,0:T(1,128)}', space=vmem, size = 0x12000, scoped, tag = 'internal scratch']
  #allocation2 [shape = 'f32[16,96]{1,0:T(8,128)}', space=vmem, size = 0x2000, scoped, tag = 'scratch operand']
  %s0 = inlined_call_operand.vmem [shape: bf16[16,32], index: 0, kind: input, shape index: {}]
  %s1 = inlined_call_operand.vmem [shape: bf16[96,32], index: 1, kind: input, shape index: {}]
  %s2 = inlined_call_operand.vmem [shape: f32[1,96], index: 2, kind: input, shape index: {}]
  %s3 = inlined_call_operand.vmem [shape: bf16[16,96], index: 3, kind: output, shape index: {}]
  %s4 = sld [smem:[#allocation0]]
  $region30: #{_lambda_.3} parent=0
    _
  %s6 = ssub.s32 1, %s4
  %s7 = scalar_select 0, %s6, %s4
  // Predicated region
  $region2: #{_lambda_.3} parent=0 // pred_check
    _
  $region3: #{_lambda_.3} parent=0 // pred_check_branch
    %9 = sbr.rel (0) target = $region5
  $region4: #{_lambda_.3} parent=0 // pred_region
    _
  $region5: #{_lambda_.3} parent=0 // pred_fallthru
    _
  // Predicated region
  $region6: #{_lambda_.3} parent=0 // pred_check
    _
  $region7: #{_lambda_.3} parent=0 // pred_check_branch
    %11 = sbr.rel (0) target = $region9
  $region8: #{_lambda_.3} parent=0 // pred_region
    _
  $region9: #{_lambda_.3} parent=0 // pred_fallthru
    _
  // Predicated region
  $region10: #{_lambda_.3} parent=0 // pred_check
    _
  $region11: #{_lambda_.3} parent=0 // pred_check_branch
    %13 = sbr.rel (0) target = $region13
  $region12: #{_lambda_.3} parent=0 // pred_region
    _
  $region13: #{_lambda_.3} parent=0 // pred_fallthru
    _
  %p15 = scmp.eq.s32.totalorder 0, 0
  // Predicated region
  $region14: #{_lambda_.3} parent=0 // pred_check
    %p16 = pneg %p15
  $region15: #{_lambda_.3} parent=0 // pred_check_branch
    %18 = sbr.rel (%p16) target = $region17
  $region16: #{_lambda_.3} parent=0 // pred_region
    %v19 = vld [vmem:[%s2] sm:$0x1]
    %v21 = vlaneseq
    %v22 = vshrl.u32 %v21, 7
    %v23 = vsub.s32 0, %v22
    %v24 = vrot.slane %v19, %v23
    %vm26 = vcmask 785408
    %27 = vst.msk [vmem:[#allocation2] sm:$0xff] %vm26, %v24
    %28 = vst.msk [vmem:[#allocation2 + $0x8] sm:$0xff] %vm26, %v24
  $region17: #{_lambda_.3} parent=0 // pred_fallthru
    _
  %v29 = vld [vmem:[#allocation2] sm:$0xff]
  %v30 = vld [vmem:[#allocation2 + $0x8] sm:$0xff]
  %v31 = vld [vmem:[%s0] sm:$0xf]
  %v32 = vld [vmem:[%s0 + $0x4] sm:$0xf]
  %v33 = vld [vmem:[%s1] sm:$0xf]
  %v34 = vld [vmem:[%s1 + $0x4] sm:$0xf]
  %v35 = vld [vmem:[%s1 + $0x8] sm:$0xf]
  %v36 = vld [vmem:[%s1 + $0xc] sm:$0xf]
  %v37 = vld [vmem:[%s1 + $0x10] sm:$0xf]
  %v38 = vld [vmem:[%s1 + $0x14] sm:$0xf]
  %v39 = vld [vmem:[%s1 + $0x18] sm:$0xf]
  %v40 = vld [vmem:[%s1 + $0x1c] sm:$0xf]
  %v41 = vld [vmem:[%s1 + $0x20] sm:$0xf]
  %v42 = vld [vmem:[%s1 + $0x24] sm:$0xf]
  %v43 = vld [vmem:[%s1 + $0x28] sm:$0xf]
  %v44 = vld [vmem:[%s1 + $0x2c] sm:$0xf]
  %v47 = vunpack.c.l.b16 %v31
  %v48 = vunpack.c.l.b16 %v32
  %v49 = vpack.c.b16 %v48, %v47
  %v62 = vunpack.c.l.b16 %v33
  %v63 = vunpack.c.l.b16 %v34
  %v64 = vunpack.c.l.b16 %v35
  %v65 = vunpack.c.l.b16 %v36
  %v66 = vunpack.c.l.b16 %v37
  %v67 = vunpack.c.l.b16 %v38
  %v68 = vunpack.c.l.b16 %v39
  %v69 = vunpack.c.l.b16 %v40
  %v70 = vunpack.c.l.b16 %v41
  %v71 = vunpack.c.l.b16 %v42
  %v72 = vunpack.c.l.b16 %v43
  %v73 = vunpack.c.l.b16 %v44
  %v74 = vpack.c.b16 %v63, %v62
  %v75 = vpack.c.b16 %v65, %v64
  %v76 = vpack.c.b16 %v67, %v66
  %v77 = vpack.c.b16 %v69, %v68
  %v78 = vpack.c.b16 %v71, %v70
  %v79 = vpack.c.b16 %v73, %v72
  %vm80 = vcmask 261120
  %v82 = vsel %vm80, %v49, 0
  %v85 = vsel %vm80, %v74, 0
  %v88 = vsel %vm80, %v75, 0
  %v91 = vsel %vm80, %v76, 0
  %v94 = vsel %vm80, %v77, 0
  %v97 = vsel %vm80, %v78, 0
  %v100 = vsel %vm80, %v79, 0
  %102 = vmatprep.subr.bf16.mxu0 0
  %103 = vmatpush1.bf16.xpose.msra.mxu0 %v85
  %104 = vmatprep.subr.bf16.mxu0 0
  %105 = vmatpush1.bf16.xpose.msra.mxu0 %v88
  %106 = vmatprep.subr.bf16.mxu0 0
  %107 = vmatpush1.bf16.xpose.msra.mxu0 %v91
  %108 = vmatprep.subr.bf16.mxu0 0
  %109 = vmatpush1.bf16.xpose.msra.mxu0 %v94
  %110 = vmatprep.subr.bf16.mxu0 0
  %111 = vmatpush1.bf16.xpose.msra.mxu0 %v97
  %112 = vmatprep.subr.bf16.mxu0 0
  %113 = vmatpush1.bf16.xpose.msra.mxu0 %v100
  %114 = vmatprep.subr.bf16.mxu0 0
  %115 = vmatpush1.bf16.xpose.msra.mxu0 0
  %116 = vmatprep.subr.bf16.mxu0 0
  %117 = vmatpush1.bf16.xpose.msra.mxu0 0
  %118 = vmatprep.subr.bf16.mxu0 0
  %119 = vmatpush1.bf16.xpose.msra.mxu0 0
  %120 = vmatprep.subr.bf16.mxu0 0
  %121 = vmatpush1.bf16.xpose.msra.mxu0 0
  %122 = vmatprep.subr.bf16.mxu0 0
  %123 = vmatpush1.bf16.xpose.msra.mxu0 0
  %124 = vmatprep.subr.bf16.mxu0 0
  %125 = vmatpush1.bf16.xpose.msra.mxu0 0
  %126 = vmatprep.subr.bf16.mxu0 0
  %127 = vmatpush1.bf16.xpose.msra.mxu0 0
  %128 = vmatprep.subr.bf16.mxu0 0
  %129 = vmatpush1.bf16.xpose.msra.mxu0 0
  %130 = vmatprep.subr.bf16.mxu0 0
  %131 = vmatpush1.bf16.xpose.msra.mxu0 0
  %132 = vmatprep.subr.bf16.mxu0 0
  %133 = vmatpush1.bf16.xpose.msra.mxu0 0
  %134 = vmatprep.mubr.bf16.mxu0 0
  %135 = vmatmul.mubr.bf16.gmra.mrb[0].mxu0 %v82
  %v136 = vpop.f32.mrb[0].mxu0
  %v137 = vadd.f32 0.0, %v136
  %v138 = vpop.f32.mrb[0].mxu0
  %v139 = vpop.f32.mrb[0].mxu0
  %v140 = vadd.f32 0.0, %v139
  %v141 = vpop.f32.mrb[0].mxu0
  %142 = vdwg.mxu0
  %v143 = vadd.f32 %v29, %v137
  %v144 = vadd.f32 %v30, %v140
  %vm145 = vcmask 785408
  %146 = vst.msk [vmem:[#allocation2] sm:$0xff] %vm145, %v143
  %147 = vst.msk [vmem:[#allocation2 + $0x8] sm:$0xff] %vm145, %v144
  // Predicated region
  $region18: #{_lambda_.3} parent=0 // pred_check
    %p148 = pneg %p15
  $region19: #{_lambda_.3} parent=0 // pred_check_branch
    %150 = sbr.rel (%p148) target = $region21
  $region20: #{_lambda_.3} parent=0 // pred_region
    %v151 = vld [vmem:[#allocation2] sm:$0xff]
    %v152 = vld [vmem:[#allocation2 + $0x8] sm:$0xff]
    %v153 = vpack.c.bf16 %v152, %v151
    %v155 = vunpack.c.l.b16 %v153
    %v156 = vunpack.c.h.b16 %v153
    %v157 = vpack.c.b16 %v155, %v155
    %v158 = vpack.c.b16 %v156, %v156
    %vm161 = vcmask 781312
    %162 = vst.msk [vmem:[%s3] sm:$0xf] %vm161, %v157
    %163 = vst.msk [vmem:[%s3 + $0x4] sm:$0xf] %vm161, %v158
  $region21: #{_lambda_.3} parent=0 // pred_fallthru
    _
  // Predicated region
  $region22: #{_lambda_.3} parent=0 // pred_check
    _
  $region23: #{_lambda_.3} parent=0 // pred_check_branch
    %165 = sbr.rel (0) target = $region25
  $region24: #{_lambda_.3} parent=0 // pred_region
    _
  $region25: #{_lambda_.3} parent=0 // pred_fallthru
    _
  // Predicated region
  $region26: #{_lambda_.3} parent=0 // pred_check
    _
  $region27: #{_lambda_.3} parent=0 // pred_check_branch
    %167 = sbr.rel (0) target = $region29
  $region28: #{_lambda_.3} parent=0 // pred_region
    _
  $region29: #{_lambda_.3} parent=0 // pred_fallthru
    _

// kernel: _lambda_.5
$region0: #{_lambda_.5}
  #allocation0 [shape = 'u32[]', space=smem, size = 0x4, offset = 0x4, fixed_abs, tag = 'smem constant byte address 0x4 - core index']
  #allocation1 [shape = 'u32[144,128]{1,0:T(1,128)}', space=vmem, size = 0x12000, scoped, tag = 'internal scratch']
  %s0 = inlined_call_operand.vmem [shape: bf16[16,32], index: 0, kind: input, shape index: {}]
  %s1 = inlined_call_operand.vmem [shape: bf16[32,32], index: 1, kind: input, shape index: {}]
  %s2 = inlined_call_operand.vmem [shape: f32[1,32], index: 2, kind: input, shape index: {}]
  %s3 = inlined_call_operand.hbm [shape: f32[16,32], index: 3, kind: output, shape index: {}]
  %s4 = sld [smem:[#allocation0]]
  $region26: #{_lambda_.5} parent=0
    _
  %s6 = ssub.s32 1, %s4
  %s7 = scalar_select 0, %s6, %s4
  $region1: #{_lambda_.5} parent=0
    #allocation2 [shape = 'u8[8192]{0}', space=vmem, size = 0x2000, scoped, tag = 'output window, operand 0, single buffered']
    #allocation3 [shape = 's32[1]{0}', space=sflag, size = 0x4, scoped, tag = 'scoped memory for _lambda_.5']
    %8 = vsyncpa [#allocation3], 0
    // Predicated region
    $region2: #{_lambda_.5} parent=1 // pred_check
      _
    $region3: #{_lambda_.5} parent=1 // pred_check_branch
      %10 = sbr.rel (0) target = $region5
    $region4: #{_lambda_.5} parent=1 // pred_region
      _
    $region5: #{_lambda_.5} parent=1 // pred_fallthru
      _
    // Predicated region
    $region6: #{_lambda_.5} parent=1 // pred_check
      _
    $region7: #{_lambda_.5} parent=1 // pred_check_branch
      %12 = sbr.rel (0) target = $region9
    $region8: #{_lambda_.5} parent=1 // pred_region
      _
    $region9: #{_lambda_.5} parent=1 // pred_fallthru
      _
    // Predicated region
    $region10: #{_lambda_.5} parent=1 // pred_check
      _
    $region11: #{_lambda_.5} parent=1 // pred_check_branch
      %14 = sbr.rel (0) target = $region13
    $region12: #{_lambda_.5} parent=1 // pred_region
      _
    $region13: #{_lambda_.5} parent=1 // pred_fallthru
      _
    %p16 = scmp.eq.s32.totalorder 0, 0
    // Predicated region
    $region14: #{_lambda_.5} parent=1 // pred_check
      %p17 = pneg %p16
    $region15: #{_lambda_.5} parent=1 // pred_check_branch
      %19 = sbr.rel (%p17) target = $region17
    $region16: #{_lambda_.5} parent=1 // pred_region
      %v20 = vld [vmem:[%s2] sm:$0x1]
      %v22 = vlaneseq
      %v23 = vshrl.u32 %v22, 7
      %v24 = vsub.s32 0, %v23
      %v25 = vrot.slane %v20, %v24
      %vm27 = vcmask 261120
      %28 = vst.msk [vmem:[#allocation2] sm:$0xff] %vm27, %v25
      %29 = vst.msk [vmem:[#allocation2 + $0x8] sm:$0xff] %vm27, %v25
    $region17: #{_lambda_.5} parent=1 // pred_fallthru
      _
    %v30 = vld [vmem:[#allocation2] sm:$0xff]
    %v31 = vld [vmem:[#allocation2 + $0x8] sm:$0xff]
    %v32 = vld [vmem:[%s0] sm:$0xf]
    %v33 = vld [vmem:[%s0 + $0x4] sm:$0xf]
    %v34 = vld [vmem:[%s1] sm:$0xf]
    %v35 = vld [vmem:[%s1 + $0x4] sm:$0xf]
    %v36 = vld [vmem:[%s1 + $0x8] sm:$0xf]
    %v37 = vld [vmem:[%s1 + $0xc] sm:$0xf]
    %v40 = vunpack.c.l.b16 %v32
    %v41 = vunpack.c.l.b16 %v33
    %v42 = vpack.c.b16 %v41, %v40
    %v47 = vunpack.c.l.b16 %v34
    %v48 = vunpack.c.l.b16 %v35
    %v49 = vunpack.c.l.b16 %v36
    %v50 = vunpack.c.l.b16 %v37
    %v51 = vpack.c.b16 %v48, %v47
    %v52 = vpack.c.b16 %v50, %v49
    %vm53 = vcmask 261120
    %v55 = vsel %vm53, %v42, 0
    %v58 = vsel %vm53, %v51, 0
    %v61 = vsel %vm53, %v52, 0
    %63 = vmatprep.subr.bf16.mxu0 0
    %64 = vmatpush1.bf16.xpose.msra.mxu0 %v58
    %65 = vmatprep.subr.bf16.mxu0 0
    %66 = vmatpush1.bf16.xpose.msra.mxu0 %v61
    %67 = vmatprep.subr.bf16.mxu0 0
    %68 = vmatpush1.bf16.xpose.msra.mxu0 0
    %69 = vmatprep.subr.bf16.mxu0 0
    %70 = vmatpush1.bf16.xpose.msra.mxu0 0
    %71 = vmatprep.subr.bf16.mxu0 0
    %72 = vmatpush1.bf16.xpose.msra.mxu0 0
    %73 = vmatprep.subr.bf16.mxu0 0
    %74 = vmatpush1.bf16.xpose.msra.mxu0 0
    %75 = vmatprep.subr.bf16.mxu0 0
    %76 = vmatpush1.bf16.xpose.msra.mxu0 0
    %77 = vmatprep.subr.bf16.mxu0 0
    %78 = vmatpush1.bf16.xpose.msra.mxu0 0
    %79 = vmatprep.subr.bf16.mxu0 0
    %80 = vmatpush1.bf16.xpose.msra.mxu0 0
    %81 = vmatprep.subr.bf16.mxu0 0
    %82 = vmatpush1.bf16.xpose.msra.mxu0 0
    %83 = vmatprep.subr.bf16.mxu0 0
    %84 = vmatpush1.bf16.xpose.msra.mxu0 0
    %85 = vmatprep.subr.bf16.mxu0 0
    %86 = vmatpush1.bf16.xpose.msra.mxu0 0
    %87 = vmatprep.subr.bf16.mxu0 0
    %88 = vmatpush1.bf16.xpose.msra.mxu0 0
    %89 = vmatprep.subr.bf16.mxu0 0
    %90 = vmatpush1.bf16.xpose.msra.mxu0 0
    %91 = vmatprep.subr.bf16.mxu0 0
    %92 = vmatpush1.bf16.xpose.msra.mxu0 0
    %93 = vmatprep.subr.bf16.mxu0 0
    %94 = vmatpush1.bf16.xpose.msra.mxu0 0
    %95 = vmatprep.mubr.bf16.mxu0 0
    %96 = vmatmul.mubr.bf16.gmra.mrb[0].mxu0 %v55
    %v97 = vpop.f32.mrb[0].mxu0
    %v98 = vadd.f32 0.0, %v97
    %v99 = vpop.f32.mrb[0].mxu0
    %v100 = vpop.f32.mrb[0].mxu0
    %v101 = vadd.f32 0.0, %v100
    %v102 = vpop.f32.mrb[0].mxu0
    %103 = vdwg.mxu0
    %v104 = vadd.f32 %v30, %v98
    %v105 = vadd.f32 %v31, %v101
    %106 = vst.msk [vmem:[#allocation2] sm:$0xff] %vm53, %v104
    %107 = vst.msk [vmem:[#allocation2 + $0x8] sm:$0xff] %vm53, %v105
    // Predicated region
    $region18: #{_lambda_.5} parent=1 // pred_check
      _
    $region19: #{_lambda_.5} parent=1 // pred_check_branch
      %109 = sbr.rel (0) target = $region21
    $region20: #{_lambda_.5} parent=1 // pred_region
      %s111 = ssub.s32 256, 256
      %112 = vsyncadd [#allocation3], %s111
      %s113 = sshll.u32 [#allocation2], 4
      %s114 = int_to_ptr.vmem [resolvable:$true] %s113
      %119 = dma.vmem_to_hbm [thread:$0]  %s114, 256, %s3, [#allocation3], 128, 128, 8
    $region21: #{_lambda_.5} parent=1 // pred_fallthru
      _
    // Predicated region
    $region22: #{_lambda_.5} parent=1 // pred_check
      _
    $region23: #{_lambda_.5} parent=1 // pred_check_branch
      %121 = sbr.rel (0) target = $region25
    $region24: #{_lambda_.5} parent=1 // pred_region
      %122 = dma.done [#allocation3], 256
    $region25: #{_lambda_.5} parent=1 // pred_fallthru
      _
    %123 = vsyncpa [#allocation3], 1

// kernel: _lambda_.4
$region0: #{_lambda_.4}
  #allocation0 [shape = 'u32[]', space=smem, size = 0x4, offset = 0x4, fixed_abs, tag = 'smem constant byte address 0x4 - core index']
  #allocation1 [shape = 'u32[144,128]{1,0:T(1,128)}', space=vmem, size = 0x12000, scoped, tag = 'internal scratch']
  %s0 = inlined_call_operand.vmem [shape: bf16[8,2,3,4,8], index: 0, kind: input, shape index: {}, may-alias: {0,1,2}]
  %s1 = inlined_call_operand.vmem [shape: bf16[8,2,3,4,8], index: 1, kind: input, shape index: {}, may-alias: {0,1,2}]
  %s2 = inlined_call_operand.vmem [shape: bf16[8,2,3,4,8], index: 2, kind: input, shape index: {}, may-alias: {0,1,2}]
  %s3 = inlined_call_operand.vmem [shape: bf16[2,8,32], index: 3, kind: output, shape index: {0}]
  %s4 = inlined_call_operand.hbm [shape: f32[2,8,8], index: 4, kind: output, shape index: {1}]
  %5 = xla_tuple %s3, %s4
  %s6 = sld [smem:[#allocation0]]
  $region176: #{_lambda_.4} parent=0
    _
  %s8 = ssub.s32 1, %s6
  %s9 = scalar_select 0, %s8, %s6
  $region1: #{_lambda_.4} parent=0
    #allocation2 [shape = 'u8[16384]{0}', space=vmem, size = 0x4000, scoped, tag = 'input window, operand 0']
    #allocation3 [shape = 'u8[16384]{0}', space=vmem, size = 0x4000, scoped, tag = 'input window, operand 1']
    #allocation4 [shape = 'u8[16384]{0}', space=vmem, size = 0x4000, scoped, tag = 'input window, operand 2']
    #allocation5 [shape = 'u8[8192]{0}', space=vmem, size = 0x2000, scoped, tag = 'output window, operand 1']
    #allocation6 [shape = 's32[2]{0}', space=sflag, size = 0x8, scoped, tag = 'scoped memory for _lambda_.4']
    %10 = vsyncpa [#allocation6], 0
    %s11 = scalar_lea.sflag [#allocation6], 1
    %12 = vsyncpa %s11, 0
    loop: start=0, step=1, limit=4
    $region2: #{_lambda_.4} parent=1 // loop_pre_header
      _
    $region3: #{_lambda_.4} parent=1 // loop_header
      %s14 = sphi 0, %s18
      %p15 = scmp.ge.s32.totalorder %s14, 4
      %s21 = sphi 0, %s33
      %s22 = sphi 0, %s29
      %s23 = sphi 0, %s21
      %s24 = sphi 0, %s22
      %s25 = sphi 0, %s23
      %s26 = sphi 0, %s24
      %s38 = sphi 0, %s40
      %s41 = sphi 0, %s38
      %s42 = sphi 0, %s41
      %s58 = sphi 0, %s42
      %s64 = sphi 0, %s66
      %s67 = sphi 0, %s64
      %s68 = sphi 0, %s67
      %s84 = sphi 0, %s68
      %s90 = sphi 0, %s92
      %s93 = sphi 0, %s90
      %s94 = sphi 0, %s93
      %s110 = sphi 0, %s94
      %s118 = sphi 0, %s120
      %s121 = sphi 0, %s118
      %s122 = sphi 0, %s121
      %s138 = sphi 0, %s122
      %s146 = sphi 0, %s148
      %s149 = sphi 0, %s146
      %s150 = sphi 0, %s149
      %s166 = sphi 0, %s150
    $region4: #{_lambda_.4} parent=1 // loop_header_branch
      %17 = sbr.rel (%p15) target = $region8
    $region5: #{_lambda_.4} parent=1 // loop_body
      %s19 = ssub.s32 %s14, 1
      %s20 = ssub.s32 %s14, 2
      %s27 = sadd.s32 1, %s22
      %p28 = scmp.ge.s32.totalorder %s27, 1
      %s29 = scalar_select %p28, 0, %s27
      %s30 = sadd.s32 1, %s21
      %s31 = scalar_select %p28, %s30, %s21
      %p32 = scmp.ge.s32.totalorder %s31, 2
      %s33 = scalar_select %p32, 0, %s31
      %s34 = ssub.s32 %s22, %s29
      %s35 = ssub.s32 %s21, %s33
      %s36 = sor.u32 %s34, %s35
      %p37 = scmp.eq.s32.totalorder %s36, 0
      %s39 = sadd.s32 %s38, 1
      %s40 = scalar_select %p37, %s38, %s39
      %p43 = pneg %p37
      %p44 = scmp.eq.s32.totalorder %s14, 1
      %p45 = por %p43, %p44
      %p46 = scmp.ne.s32.totalorder %s38, %s41
      %p47 = scmp.eq.s32.totalorder %s14, 0
      %p48 = por %p46, %p47
      %p49 = scmp.ne.s32.totalorder %s38, %s41
      %p50 = scmp.eq.s32.totalorder %s19, 1
      %p51 = por %p49, %p50
      %p52 = scmp.ne.s32.totalorder %s41, %s42
      %p53 = scmp.eq.s32.totalorder %s19, 0
      %p54 = por %p52, %p53
      %p55 = scmp.ne.s32.totalorder %s41, %s42
      %p56 = scmp.eq.s32.totalorder %s20, 1
      %p57 = por %p55, %p56
      %p59 = scmp.ne.s32.totalorder %s42, %s58
      %p60 = scmp.eq.s32.totalorder %s20, 0
      %p61 = por %p59, %p60
      %s62 = ssub.s32 %s21, %s33
      %p63 = scmp.eq.s32.totalorder %s62, 0
      %s65 = sadd.s32 %s64, 1
      %s66 = scalar_select %p63, %s64, %s65
      %p69 = pneg %p63
      %p70 = scmp.eq.s32.totalorder %s14, 1
      %p71 = por %p69, %p70
      %p72 = scmp.ne.s32.totalorder %s64, %s67
      %p73 = scmp.eq.s32.totalorder %s14, 0
      %p74 = por %p72, %p73
      %p75 = scmp.ne.s32.totalorder %s64, %s67
      %p76 = scmp.eq.s32.totalorder %s19, 1
      %p77 = por %p75, %p76
      %p78 = scmp.ne.s32.totalorder %s67, %s68
      %p79 = scmp.eq.s32.totalorder %s19, 0
      %p80 = por %p78, %p79
      %p81 = scmp.ne.s32.totalorder %s67, %s68
      %p82 = scmp.eq.s32.totalorder %s20, 1
      %p83 = por %p81, %p82
      %p85 = scmp.ne.s32.totalorder %s68, %s84
      %p86 = scmp.eq.s32.totalorder %s20, 0
      %p87 = por %p85, %p86
      %s88 = ssub.s32 %s21, %s33
      %p89 = scmp.eq.s32.totalorder %s88, 0
      %s91 = sadd.s32 %s90, 1
      %s92 = scalar_select %p89, %s90, %s91
      %p95 = pneg %p89
      %p96 = scmp.eq.s32.totalorder %s14, 1
      %p97 = por %p95, %p96
      %p98 = scmp.ne.s32.totalorder %s90, %s93
      %p99 = scmp.eq.s32.totalorder %s14, 0
      %p100 = por %p98, %p99
      %p101 = scmp.ne.s32.totalorder %s90, %s93
      %p102 = scmp.eq.s32.totalorder %s19, 1
      %p103 = por %p101, %p102
      %p104 = scmp.ne.s32.totalorder %s93, %s94
      %p105 = scmp.eq.s32.totalorder %s19, 0
      %p106 = por %p104, %p105
      %p107 = scmp.ne.s32.totalorder %s93, %s94
      %p108 = scmp.eq.s32.totalorder %s20, 1
      %p109 = por %p107, %p108
      %p111 = scmp.ne.s32.totalorder %s94, %s110
      %p112 = scmp.eq.s32.totalorder %s20, 0
      %p113 = por %p111, %p112
      %s114 = ssub.s32 %s21, %s33
      %s115 = ssub.s32 %s22, %s29
      %s116 = sor.u32 %s114, %s115
      %p117 = scmp.eq.s32.totalorder %s116, 0
      %s119 = sadd.s32 %s118, 1
      %s120 = scalar_select %p117, %s118, %s119
      %p123 = pneg %p117
      %p124 = scmp.eq.s32.totalorder %s14, 1
      %p125 = por %p123, %p124
      %p126 = scmp.ne.s32.totalorder %s118, %s121
      %p127 = scmp.eq.s32.totalorder %s14, 0
      %p128 = por %p126, %p127
      %p129 = scmp.ne.s32.totalorder %s118, %s121
      %p130 = scmp.eq.s32.totalorder %s19, 1
      %p131 = por %p129, %p130
      %p132 = scmp.ne.s32.totalorder %s121, %s122
      %p133 = scmp.eq.s32.totalorder %s19, 0
      %p134 = por %p132, %p133
      %p135 = scmp.ne.s32.totalorder %s121, %s122
      %p136 = scmp.eq.s32.totalorder %s20, 1
      %p137 = por %p135, %p136
      %p139 = scmp.ne.s32.totalorder %s122, %s138
      %p140 = scmp.eq.s32.totalorder %s20, 0
      %p141 = por %p139, %p140
      %s142 = ssub.s32 %s21, %s33
      %s143 = ssub.s32 %s22, %s29
      %s144 = sor.u32 %s142, %s143
      %p145 = scmp.eq.s32.totalorder %s144, 0
      %s147 = sadd.s32 %s146, 1
      %s148 = scalar_select %p145, %s146, %s147
      %p151 = pneg %p145
      %p152 = scmp.eq.s32.totalorder %s14, 1
      %p153 = por %p151, %p152
      %p154 = scmp.ne.s32.totalorder %s146, %s149
      %p155 = scmp.eq.s32.totalorder %s14, 0
      %p156 = por %p154, %p155
      %p157 = scmp.ne.s32.totalorder %s146, %s149
      %p158 = scmp.eq.s32.totalorder %s19, 1
      %p159 = por %p157, %p158
      %p160 = scmp.ne.s32.totalorder %s149, %s150
      %p161 = scmp.eq.s32.totalorder %s19, 0
      %p162 = por %p160, %p161
      %p163 = scmp.ne.s32.totalorder %s149, %s150
      %p164 = scmp.eq.s32.totalorder %s20, 1
      %p165 = por %p163, %p164
      %p167 = scmp.ne.s32.totalorder %s150, %s166
      %p168 = scmp.eq.s32.totalorder %s20, 0
      %p169 = por %p167, %p168
      %p170 = scmp.le.s32.totalorder 1, %s14
      %p171 = scmp.lt.s32.totalorder %s14, 3
      %p172 = pnand %p170, %p171
      %p173 = pneg %p172
      // Predicated region
      $region9: #{_lambda_.4} parent=5 // pred_check
        _
      $region10: #{_lambda_.4} parent=5 // pred_check_branch
        %175 = sbr.rel (%p172) target = $region12
      $region11: #{_lambda_.4} parent=5 // pred_region
        %s176 = ssub.s32 %s14, 1
      $region12: #{_lambda_.4} parent=5 // pred_fallthru
        _
      %p177 = scmp.lt.s32.totalorder %s14, 2
      // Predicated region
      $region13: #{_lambda_.4} parent=5 // pred_check
        %p178 = pneg %p177
      $region14: #{_lambda_.4} parent=5 // pred_check_branch
        %180 = sbr.rel (%p178) target = $region16
      $region15: #{_lambda_.4} parent=5 // pred_region
        // Predicated region
        $region17: #{_lambda_.4} parent=15 // pred_check
          %p181 = pneg %p48
        $region18: #{_lambda_.4} parent=15 // pred_check_branch
          %183 = sbr.rel (%p181) target = $region20
        $region19: #{_lambda_.4} parent=15 // pred_region
          %s184 = sand.u32 %s38, 1
          %s185 = sand.u32 %s38, 1
          %s186 = smul.addr %s185, 16
          %s187 = scalar_lea.vmem [#allocation2], %s186
          %s188 = smul.u32 8, %s22
          %s189 = smul.addr %s21, 3
          %s190 = smul.addr %s188, 6
          %s191 = sadd.s32 %s189, %s190
          %s192 = smul.addr %s191, 2
          %s193 = scalar_lea.vmem %s0, %s192
          // Predicated region
          $region21: #{_lambda_.4} parent=19 // pred_check
            _
          $region22: #{_lambda_.4} parent=19 // pred_check_branch
            %195 = sbr.rel (0) target = $region24
          $region23: #{_lambda_.4} parent=19 // pred_region
            // Predicated region
            $region25: #{_lambda_.4} parent=23 // pred_check
              _
            $region26: #{_lambda_.4} parent=23 // pred_check_branch
              %197 = sbr.rel target = $region28
            $region27: #{_lambda_.4} parent=23 // pred_region
              // Predicated region
              $region40: #{_lambda_.4} parent=27 // pred_check
                _
              $region41: #{_lambda_.4} parent=27 // pred_check_branch
                %226 = sbr.rel (0) target = $region43
              $region42: #{_lambda_.4} parent=27 // pred_region
                loop: start=0, step=1, limit=1
                $region44: #{_lambda_.4} parent=42 // loop_pre_header
                  _
                $region45: #{_lambda_.4} parent=42 // loop_header
                  %s228 = sphi 0, %s232
                  %p229 = scmp.ge.s32.totalorder %s228, 1
                  %s233 = sphi %s193, %s193
                  %s234 = sphi %s187, %s187
                $region46: #{_lambda_.4} parent=42 // loop_header_branch
                  %231 = sbr.rel (%p229) target = $region50
                $region47: #{_lambda_.4} parent=42 // loop_body
                  _
                $region48: #{_lambda_.4} parent=42 // loop_footer
                  %s232 = sadd.s32 1, %s228
                $region49: #{_lambda_.4} parent=42 // loop_footer_branch
                  %227 = sbr.rel target = $region45
                $region50: #{_lambda_.4} parent=42 // loop_exit
                  _
                loop: start=0, step=1, limit=1
                $region51: #{_lambda_.4} parent=42 // loop_pre_header
                  _
                $region52: #{_lambda_.4} parent=42 // loop_header
                  %s237 = sphi 0, %s241
                  %p238 = scmp.ge.s32.totalorder %s237, 1
                  %s242 = sphi %s193, %s193
                  %s243 = sphi %s187, %s187
                $region53: #{_lambda_.4} parent=42 // loop_header_branch
                  %240 = sbr.rel (%p238) target = $region57
                $region54: #{_lambda_.4} parent=42 // loop_body
                  %v244 = vld [vmem:[%s242] sm:$0x3]
                  %245 = vst [vmem:[%s243] sm:$0x3] %v244
                  %v246 = vld [vmem:[%s242 + $0xc] sm:$0x3]
                  %247 = vst [vmem:[%s243 + $0x2] sm:$0x3] %v246
                  %v248 = vld [vmem:[%s242 + $0x18] sm:$0x3]
                  %249 = vst [vmem:[%s243 + $0x4] sm:$0x3] %v248
                  %v250 = vld [vmem:[%s242 + $0x24] sm:$0x3]
                  %251 = vst [vmem:[%s243 + $0x6] sm:$0x3] %v250
                  %v252 = vld [vmem:[%s242 + $0x30] sm:$0x3]
                  %253 = vst [vmem:[%s243 + $0x8] sm:$0x3] %v252
                  %v254 = vld [vmem:[%s242 + $0x3c] sm:$0x3]
                  %255 = vst [vmem:[%s243 + $0xa] sm:$0x3] %v254
                  %v256 = vld [vmem:[%s242 + $0x48] sm:$0x3]
                  %257 = vst [vmem:[%s243 + $0xc] sm:$0x3] %v256
                  %v258 = vld [vmem:[%s242 + $0x54] sm:$0x3]
                  %259 = vst [vmem:[%s243 + $0xe] sm:$0x3] %v258
                $region55: #{_lambda_.4} parent=42 // loop_footer
                  %s241 = sadd.s32 1, %s237
                $region56: #{_lambda_.4} parent=42 // loop_footer_branch
                  %236 = sbr.rel target = $region52
                $region57: #{_lambda_.4} parent=42 // loop_exit
                  _
              $region43: #{_lambda_.4} parent=27 // pred_fallthru
                _
            $region28: #{_lambda_.4} parent=23 // pred_fallthru
              _
            // Predicated region
            $region29: #{_lambda_.4} parent=23 // pred_check
              _
            $region30: #{_lambda_.4} parent=23 // pred_check_branch
              %199 = sbr.rel (0) target = $region32
            $region31: #{_lambda_.4} parent=23 // pred_region
              loop: start=0, step=1, limit=1
              $region33: #{_lambda_.4} parent=31 // loop_pre_header
                _
              $region34: #{_lambda_.4} parent=31 // loop_header
                %s202 = sphi 0, %s206
                %p203 = scmp.ge.s32.totalorder %s202, 1
                %s207 = sphi %s193, %s193
                %s208 = sphi %s187, %s187
              $region35: #{_lambda_.4} parent=31 // loop_header_branch
                %205 = sbr.rel (%p203) target = $region39
              $region36: #{_lambda_.4} parent=31 // loop_body
                %v209 = vld [vmem:[%s207] sm:$0x3]
                %210 = vst [vmem:[%s208] sm:$0x3] %v209
                %v211 = vld [vmem:[%s207 + $0xc] sm:$0x3]
                %212 = vst [vmem:[%s208 + $0x2] sm:$0x3] %v211
                %v213 = vld [vmem:[%s207 + $0x18] sm:$0x3]
                %214 = vst [vmem:[%s208 + $0x4] sm:$0x3] %v213
                %v215 = vld [vmem:[%s207 + $0x24] sm:$0x3]
                %216 = vst [vmem:[%s208 + $0x6] sm:$0x3] %v215
                %v217 = vld [vmem:[%s207 + $0x30] sm:$0x3]
                %218 = vst [vmem:[%s208 + $0x8] sm:$0x3] %v217
                %v219 = vld [vmem:[%s207 + $0x3c] sm:$0x3]
                %220 = vst [vmem:[%s208 + $0xa] sm:$0x3] %v219
                %v221 = vld [vmem:[%s207 + $0x48] sm:$0x3]
                %222 = vst [vmem:[%s208 + $0xc] sm:$0x3] %v221
                %v223 = vld [vmem:[%s207 + $0x54] sm:$0x3]
                %224 = vst [vmem:[%s208 + $0xe] sm:$0x3] %v223
              $region37: #{_lambda_.4} parent=31 // loop_footer
                %s206 = sadd.s32 1, %s202
              $region38: #{_lambda_.4} parent=31 // loop_footer_branch
                %201 = sbr.rel target = $region34
              $region39: #{_lambda_.4} parent=31 // loop_exit
                _
            $region32: #{_lambda_.4} parent=23 // pred_fallthru
              _
          $region24: #{_lambda_.4} parent=19 // pred_fallthru
            _
          %260 = vnop
        $region20: #{_lambda_.4} parent=15 // pred_fallthru
          _
        // Predicated region
        $region58: #{_lambda_.4} parent=15 // pred_check
          %p261 = pneg %p74
        $region59: #{_lambda_.4} parent=15 // pred_check_branch
          %263 = sbr.rel (%p261) target = $region61
        $region60: #{_lambda_.4} parent=15 // pred_region
          %s264 = sand.u32 %s64, 1
          %s265 = sand.u32 %s64, 1
          %s266 = smul.addr %s265, 16
          %s267 = scalar_lea.vmem [#allocation3], %s266
          %s268 = smul.addr %s21, 3
          %s269 = sadd.s32 1, %s268
          %s270 = smul.addr %s269, 2
          %s271 = scalar_lea.vmem %s1, %s270
          // Predicated region
          $region62: #{_lambda_.4} parent=60 // pred_check
            _
          $region63: #{_lambda_.4} parent=60 // pred_check_branch
            %273 = sbr.rel (0) target = $region65
          $region64: #{_lambda_.4} parent=60 // pred_region
            // Predicated region
            $region66: #{_lambda_.4} parent=64 // pred_check
              _
            $region67: #{_lambda_.4} parent=64 // pred_check_branch
              %275 = sbr.rel target = $region69
            $region68: #{_lambda_.4} parent=64 // pred_region
              // Predicated region
              $region81: #{_lambda_.4} parent=68 // pred_check
                _
              $region82: #{_lambda_.4} parent=68 // pred_check_branch
                %304 = sbr.rel (0) target = $region84
              $region83: #{_lambda_.4} parent=68 // pred_region
                loop: start=0, step=1, limit=1
                $region85: #{_lambda_.4} parent=83 // loop_pre_header
                  _
                $region86: #{_lambda_.4} parent=83 // loop_header
                  %s306 = sphi 0, %s310
                  %p307 = scmp.ge.s32.totalorder %s306, 1
                  %s311 = sphi %s271, %s271
                  %s312 = sphi %s267, %s267
                $region87: #{_lambda_.4} parent=83 // loop_header_branch
                  %309 = sbr.rel (%p307) target = $region91
                $region88: #{_lambda_.4} parent=83 // loop_body
                  _
                $region89: #{_lambda_.4} parent=83 // loop_footer
                  %s310 = sadd.s32 1, %s306
                $region90: #{_lambda_.4} parent=83 // loop_footer_branch
                  %305 = sbr.rel target = $region86
                $region91: #{_lambda_.4} parent=83 // loop_exit
                  _
                loop: start=0, step=1, limit=1
                $region92: #{_lambda_.4} parent=83 // loop_pre_header
                  _
                $region93: #{_lambda_.4} parent=83 // loop_header
                  %s315 = sphi 0, %s319
                  %p316 = scmp.ge.s32.totalorder %s315, 1
                  %s320 = sphi %s271, %s271
                  %s321 = sphi %s267, %s267
                $region94: #{_lambda_.4} parent=83 // loop_header_branch
                  %318 = sbr.rel (%p316) target = $region98
                $region95: #{_lambda_.4} parent=83 // loop_body
                  %v322 = vld [vmem:[%s320] sm:$0x3]
                  %323 = vst [vmem:[%s321] sm:$0x3] %v322
                  %v324 = vld [vmem:[%s320 + $0xc] sm:$0x3]
                  %325 = vst [vmem:[%s321 + $0x2] sm:$0x3] %v324
                  %v326 = vld [vmem:[%s320 + $0x18] sm:$0x3]
                  %327 = vst [vmem:[%s321 + $0x4] sm:$0x3] %v326
                  %v328 = vld [vmem:[%s320 + $0x24] sm:$0x3]
                  %329 = vst [vmem:[%s321 + $0x6] sm:$0x3] %v328
                  %v330 = vld [vmem:[%s320 + $0x30] sm:$0x3]
                  %331 = vst [vmem:[%s321 + $0x8] sm:$0x3] %v330
                  %v332 = vld [vmem:[%s320 + $0x3c] sm:$0x3]
                  %333 = vst [vmem:[%s321 + $0xa] sm:$0x3] %v332
                  %v334 = vld [vmem:[%s320 + $0x48] sm:$0x3]
                  %335 = vst [vmem:[%s321 + $0xc] sm:$0x3] %v334
                  %v336 = vld [vmem:[%s320 + $0x54] sm:$0x3]
                  %337 = vst [vmem:[%s321 + $0xe] sm:$0x3] %v336
                $region96: #{_lambda_.4} parent=83 // loop_footer
                  %s319 = sadd.s32 1, %s315
                $region97: #{_lambda_.4} parent=83 // loop_footer_branch
                  %314 = sbr.rel target = $region93
                $region98: #{_lambda_.4} parent=83 // loop_exit
                  _
              $region84: #{_lambda_.4} parent=68 // pred_fallthru
                _
            $region69: #{_lambda_.4} parent=64 // pred_fallthru
              _
            // Predicated region
            $region70: #{_lambda_.4} parent=64 // pred_check
              _
            $region71: #{_lambda_.4} parent=64 // pred_check_branch
              %277 = sbr.rel (0) target = $region73
            $region72: #{_lambda_.4} parent=64 // pred_region
              loop: start=0, step=1, limit=1
              $region74: #{_lambda_.4} parent=72 // loop_pre_header
                _
              $region75: #{_lambda_.4} parent=72 // loop_header
                %s280 = sphi 0, %s284
                %p281 = scmp.ge.s32.totalorder %s280, 1
                %s285 = sphi %s271, %s271
                %s286 = sphi %s267, %s267
              $region76: #{_lambda_.4} parent=72 // loop_header_branch
                %283 = sbr.rel (%p281) target = $region80
              $region77: #{_lambda_.4} parent=72 // loop_body
                %v287 = vld [vmem:[%s285] sm:$0x3]
                %288 = vst [vmem:[%s286] sm:$0x3] %v287
                %v289 = vld [vmem:[%s285 + $0xc] sm:$0x3]
                %290 = vst [vmem:[%s286 + $0x2] sm:$0x3] %v289
                %v291 = vld [vmem:[%s285 + $0x18] sm:$0x3]
                %292 = vst [vmem:[%s286 + $0x4] sm:$0x3] %v291
                %v293 = vld [vmem:[%s285 + $0x24] sm:$0x3]
                %294 = vst [vmem:[%s286 + $0x6] sm:$0x3] %v293
                %v295 = vld [vmem:[%s285 + $0x30] sm:$0x3]
                %296 = vst [vmem:[%s286 + $0x8] sm:$0x3] %v295
                %v297 = vld [vmem:[%s285 + $0x3c] sm:$0x3]
                %298 = vst [vmem:[%s286 + $0xa] sm:$0x3] %v297
                %v299 = vld [vmem:[%s285 + $0x48] sm:$0x3]
                %300 = vst [vmem:[%s286 + $0xc] sm:$0x3] %v299
                %v301 = vld [vmem:[%s285 + $0x54] sm:$0x3]
                %302 = vst [vmem:[%s286 + $0xe] sm:$0x3] %v301
              $region78: #{_lambda_.4} parent=72 // loop_footer
                %s284 = sadd.s32 1, %s280
              $region79: #{_lambda_.4} parent=72 // loop_footer_branch
                %279 = sbr.rel target = $region75
              $region80: #{_lambda_.4} parent=72 // loop_exit
                _
            $region73: #{_lambda_.4} parent=64 // pred_fallthru
              _
          $region65: #{_lambda_.4} parent=60 // pred_fallthru
            _
          %338 = vnop
        $region61: #{_lambda_.4} parent=15 // pred_fallthru
          _
        // Predicated region
        $region99: #{_lambda_.4} parent=15 // pred_check
          %p339 = pneg %p100
        $region100: #{_lambda_.4} parent=15 // pred_check_branch
          %341 = sbr.rel (%p339) target = $region102
        $region101: #{_lambda_.4} parent=15 // pred_region
          %s342 = sand.u32 %s90, 1
          %s343 = sand.u32 %s90, 1
          %s344 = smul.addr %s343, 16
          %s345 = scalar_lea.vmem [#allocation4], %s344
          %s346 = smul.addr %s21, 3
          %s347 = sadd.s32 2, %s346
          %s348 = smul.addr %s347, 2
          %s349 = scalar_lea.vmem %s2, %s348
          // Predicated region
          $region103: #{_lambda_.4} parent=101 // pred_check
            _
          $region104: #{_lambda_.4} parent=101 // pred_check_branch
            %351 = sbr.rel (0) target = $region106
          $region105: #{_lambda_.4} parent=101 // pred_region
            // Predicated region
            $region107: #{_lambda_.4} parent=105 // pred_check
              _
            $region108: #{_lambda_.4} parent=105 // pred_check_branch
              %353 = sbr.rel target = $region110
            $region109: #{_lambda_.4} parent=105 // pred_region
              // Predicated region
              $region122: #{_lambda_.4} parent=109 // pred_check
                _
              $region123: #{_lambda_.4} parent=109 // pred_check_branch
                %382 = sbr.rel (0) target = $region125
              $region124: #{_lambda_.4} parent=109 // pred_region
                loop: start=0, step=1, limit=1
                $region126: #{_lambda_.4} parent=124 // loop_pre_header
                  _
                $region127: #{_lambda_.4} parent=124 // loop_header
                  %s384 = sphi 0, %s388
                  %p385 = scmp.ge.s32.totalorder %s384, 1
                  %s389 = sphi %s349, %s349
                  %s390 = sphi %s345, %s345
                $region128: #{_lambda_.4} parent=124 // loop_header_branch
                  %387 = sbr.rel (%p385) target = $region132
                $region129: #{_lambda_.4} parent=124 // loop_body
                  _
                $region130: #{_lambda_.4} parent=124 // loop_footer
                  %s388 = sadd.s32 1, %s384
                $region131: #{_lambda_.4} parent=124 // loop_footer_branch
                  %383 = sbr.rel target = $region127
                $region132: #{_lambda_.4} parent=124 // loop_exit
                  _
                loop: start=0, step=1, limit=1
                $region133: #{_lambda_.4} parent=124 // loop_pre_header
                  _
                $region134: #{_lambda_.4} parent=124 // loop_header
                  %s393 = sphi 0, %s397
                  %p394 = scmp.ge.s32.totalorder %s393, 1
                  %s398 = sphi %s349, %s349
                  %s399 = sphi %s345, %s345
                $region135: #{_lambda_.4} parent=124 // loop_header_branch
                  %396 = sbr.rel (%p394) target = $region139
                $region136: #{_lambda_.4} parent=124 // loop_body
                  %v400 = vld [vmem:[%s398] sm:$0x3]
                  %401 = vst [vmem:[%s399] sm:$0x3] %v400
                  %v402 = vld [vmem:[%s398 + $0xc] sm:$0x3]
                  %403 = vst [vmem:[%s399 + $0x2] sm:$0x3] %v402
                  %v404 = vld [vmem:[%s398 + $0x18] sm:$0x3]
                  %405 = vst [vmem:[%s399 + $0x4] sm:$0x3] %v404
                  %v406 = vld [vmem:[%s398 + $0x24] sm:$0x3]
                  %407 = vst [vmem:[%s399 + $0x6] sm:$0x3] %v406
                  %v408 = vld [vmem:[%s398 + $0x30] sm:$0x3]
                  %409 = vst [vmem:[%s399 + $0x8] sm:$0x3] %v408
                  %v410 = vld [vmem:[%s398 + $0x3c] sm:$0x3]
                  %411 = vst [vmem:[%s399 + $0xa] sm:$0x3] %v410
                  %v412 = vld [vmem:[%s398 + $0x48] sm:$0x3]
                  %413 = vst [vmem:[%s399 + $0xc] sm:$0x3] %v412
                  %v414 = vld [vmem:[%s398 + $0x54] sm:$0x3]
                  %415 = vst [vmem:[%s399 + $0xe] sm:$0x3] %v414
                $region137: #{_lambda_.4} parent=124 // loop_footer
                  %s397 = sadd.s32 1, %s393
                $region138: #{_lambda_.4} parent=124 // loop_footer_branch
                  %392 = sbr.rel target = $region134
                $region139: #{_lambda_.4} parent=124 // loop_exit
                  _
              $region125: #{_lambda_.4} parent=109 // pred_fallthru
                _
            $region110: #{_lambda_.4} parent=105 // pred_fallthru
              _
            // Predicated region
            $region111: #{_lambda_.4} parent=105 // pred_check
              _
            $region112: #{_lambda_.4} parent=105 // pred_check_branch
              %355 = sbr.rel (0) target = $region114
            $region113: #{_lambda_.4} parent=105 // pred_region
              loop: start=0, step=1, limit=1
              $region115: #{_lambda_.4} parent=113 // loop_pre_header
                _
              $region116: #{_lambda_.4} parent=113 // loop_header
                %s358 = sphi 0, %s362
                %p359 = scmp.ge.s32.totalorder %s358, 1
                %s363 = sphi %s349, %s349
                %s364 = sphi %s345, %s345
              $region117: #{_lambda_.4} parent=113 // loop_header_branch
                %361 = sbr.rel (%p359) target = $region121
              $region118: #{_lambda_.4} parent=113 // loop_body
                %v365 = vld [vmem:[%s363] sm:$0x3]
                %366 = vst [vmem:[%s364] sm:$0x3] %v365
                %v367 = vld [vmem:[%s363 + $0xc] sm:$0x3]
                %368 = vst [vmem:[%s364 + $0x2] sm:$0x3] %v367
                %v369 = vld [vmem:[%s363 + $0x18] sm:$0x3]
                %370 = vst [vmem:[%s364 + $0x4] sm:$0x3] %v369
                %v371 = vld [vmem:[%s363 + $0x24] sm:$0x3]
                %372 = vst [vmem:[%s364 + $0x6] sm:$0x3] %v371
                %v373 = vld [vmem:[%s363 + $0x30] sm:$0x3]
                %374 = vst [vmem:[%s364 + $0x8] sm:$0x3] %v373
                %v375 = vld [vmem:[%s363 + $0x3c] sm:$0x3]
                %376 = vst [vmem:[%s364 + $0xa] sm:$0x3] %v375
                %v377 = vld [vmem:[%s363 + $0x48] sm:$0x3]
                %378 = vst [vmem:[%s364 + $0xc] sm:$0x3] %v377
                %v379 = vld [vmem:[%s363 + $0x54] sm:$0x3]
                %380 = vst [vmem:[%s364 + $0xe] sm:$0x3] %v379
              $region119: #{_lambda_.4} parent=113 // loop_footer
                %s362 = sadd.s32 1, %s358
              $region120: #{_lambda_.4} parent=113 // loop_footer_branch
                %357 = sbr.rel target = $region116
              $region121: #{_lambda_.4} parent=113 // loop_exit
                _
            $region114: #{_lambda_.4} parent=105 // pred_fallthru
              _
          $region106: #{_lambda_.4} parent=101 // pred_fallthru
            _
          %416 = vnop
        $region102: #{_lambda_.4} parent=15 // pred_fallthru
          _
      $region16: #{_lambda_.4} parent=5 // pred_fallthru
        _
      %p417 = scmp.le.s32.totalorder 1, %s14
      %p418 = scmp.lt.s32.totalorder %s14, 3
      %p419 = pnand %p417, %p418
      %p420 = pneg %p419
      // Predicated region
      $region140: #{_lambda_.4} parent=5 // pred_check
        _
      $region141: #{_lambda_.4} parent=5 // pred_check_branch
        %422 = sbr.rel (%p419) target = $region143
      $region142: #{_lambda_.4} parent=5 // pred_region
        %s423 = ssub.s32 %s14, 1
        %s424 = sand.u32 %s41, 1
        %s425 = sand.u32 %s41, 1
        %s426 = smul.addr %s425, 16
        %s427 = scalar_lea.vmem [#allocation2], %s426
        // Predicated region
        $region144: #{_lambda_.4} parent=142 // pred_check
          %p428 = pneg %p54
        $region145: #{_lambda_.4} parent=142 // pred_check_branch
          %430 = sbr.rel (%p428) target = $region147
        $region146: #{_lambda_.4} parent=142 // pred_region
          _
        $region147: #{_lambda_.4} parent=142 // pred_fallthru
          _
        %s431 = sand.u32 %s67, 1
        %s432 = sand.u32 %s67, 1
        %s433 = smul.addr %s432, 16
        %s434 = scalar_lea.vmem [#allocation3], %s433
        // Predicated region
        $region148: #{_lambda_.4} parent=142 // pred_check
          %p435 = pneg %p80
        $region149: #{_lambda_.4} parent=142 // pred_check_branch
          %437 = sbr.rel (%p435) target = $region151
        $region150: #{_lambda_.4} parent=142 // pred_region
          _
        $region151: #{_lambda_.4} parent=142 // pred_fallthru
          _
        %s438 = sand.u32 %s93, 1
        %s439 = sand.u32 %s93, 1
        %s440 = smul.addr %s439, 16
        %s441 = scalar_lea.vmem [#allocation4], %s440
        // Predicated region
        $region152: #{_lambda_.4} parent=142 // pred_check
          %p442 = pneg %p106
        $region153: #{_lambda_.4} parent=142 // pred_check_branch
          %444 = sbr.rel (%p442) target = $region155
        $region154: #{_lambda_.4} parent=142 // pred_region
          _
        $region155: #{_lambda_.4} parent=142 // pred_fallthru
          _
        %s445 = sand.u32 %s41, 1
        %s446 = sand.u32 %s41, 1
        %s447 = smul.addr %s446, 16
        %s448 = scalar_lea.vmem [#allocation2], %s447
        %p449 = pneg %p54
        %p450 = pneg %p51
        %s451 = sand.u32 %s67, 1
        %s452 = sand.u32 %s67, 1
        %s453 = smul.addr %s452, 16
        %s454 = scalar_lea.vmem [#allocation3], %s453
        %p455 = pneg %p80
        %p456 = pneg %p77
        %s457 = sand.u32 %s93, 1
        %s458 = sand.u32 %s93, 1
        %s459 = smul.addr %s458, 16
        %s460 = scalar_lea.vmem [#allocation4], %s459
        %p461 = pneg %p106
        %p462 = pneg %p103
        %p463 = pneg %p134
        %p464 = pneg %p131
        %p465 = scmp.lt.s32.totalorder %s23, 1
        %s466 = scalar_select %p465, %s23, 1
        %p467 = scmp.lt.s32.totalorder %s24, 0
        %s468 = scalar_select %p467, %s24, 0
        %s469 = sadd.s32 %s468, %s466
        %s470 = smul.addr %s469, 4
        %s471 = scalar_lea.vmem %s3, %s470
        %p472 = pneg %p162
        %p473 = pneg %p159
        %s474 = sand.u32 %s149, 1
        %s475 = scalar_lea.sflag [#allocation6], %s474
        %s476 = sand.u32 %s149, 1
        %s477 = smul.addr %s476, 8
        %s478 = scalar_lea.vmem [#allocation5], %s477
        %s479 = smul.u32 8, %s24
        %p480 = scmp.lt.s32.totalorder %s23, 1
        %s481 = scalar_select %p480, %s23, 1
        %p482 = scmp.lt.s32.totalorder %s24, 0
        %s483 = scalar_select %p482, %s24, 0
        %s484 = sadd.s32 %s483, %s481
        %s485 = smul.addr %s484, 4
        %s486 = scalar_lea.vmem %s3, %s485
        %vm489 = vcmask 64512
        %490 = vst.msk [vmem:[%s478] sm:$0xff] %vm489, 0.0
        %v491 = vld [vmem:[%s427] sm:$0x1]
        %v492 = vld [vmem:[%s427 + $0x2] sm:$0x1]
        %v493 = vld [vmem:[%s427 + $0x4] sm:$0x1]
        %v494 = vld [vmem:[%s427 + $0x6] sm:$0x1]
        %v495 = vld [vmem:[%s427 + $0x8] sm:$0x1]
        %v496 = vld [vmem:[%s427 + $0xa] sm:$0x1]
        %v497 = vld [vmem:[%s427 + $0xc] sm:$0x1]
        %v498 = vld [vmem:[%s427 + $0xe] sm:$0x1]
        %v499 = vmul.bf16 %v491, 1052065461
        %v500 = vmul.bf16 %v492, 1052065461
        %v501 = vmul.bf16 %v493, 1052065461
        %v502 = vmul.bf16 %v494, 1052065461
        %v503 = vmul.bf16 %v495, 1052065461
        %v504 = vmul.bf16 %v496, 1052065461
        %v505 = vmul.bf16 %v497, 1052065461
        %v506 = vmul.bf16 %v498, 1052065461
        %v507 = vld [vmem:[%s434] sm:$0x1]
        %v508 = vld [vmem:[%s434 + $0x2] sm:$0x1]
        %v509 = vld [vmem:[%s434 + $0x4] sm:$0x1]
        %v510 = vld [vmem:[%s434 + $0x6] sm:$0x1]
        %v511 = vld [vmem:[%s434 + $0x8] sm:$0x1]
        %v512 = vld [vmem:[%s434 + $0xa] sm:$0x1]
        %v513 = vld [vmem:[%s434 + $0xc] sm:$0x1]
        %v514 = vld [vmem:[%s434 + $0xe] sm:$0x1]
        %v515 = vld [vmem:[%s441] sm:$0x1]
        %v516 = vld [vmem:[%s441 + $0x2] sm:$0x1]
        %v517 = vld [vmem:[%s441 + $0x4] sm:$0x1]
        %v518 = vld [vmem:[%s441 + $0x6] sm:$0x1]
        %v519 = vld [vmem:[%s441 + $0x8] sm:$0x1]
        %v520 = vld [vmem:[%s441 + $0xa] sm:$0x1]
        %v521 = vld [vmem:[%s441 + $0xc] sm:$0x1]
        %v522 = vld [vmem:[%s441 + $0xe] sm:$0x1]
        %v532 = vunpack.c.l.s4 1983009808
        %v533 = vunpack.c.0.s8 %v532
        %v534 = vlaneseq
        %v535 = vshrl.u32 %v534, 7
        %v536 = vsub.s32 %v533, %v535
        %v537 = vrot.slane %v499, %v536
        %v539 = vunpack.c.l.s4 1983009808
        %v540 = vunpack.c.0.s8 %v539
        %v541 = vlaneseq
        %v542 = vshrl.u32 %v541, 7
        %v543 = vsub.s32 %v540, %v542
        %v544 = vrot.slane %v500, %v543
        %v546 = vunpack.c.l.s4 1983009808
        %v547 = vunpack.c.0.s8 %v546
        %v548 = vlaneseq
        %v549 = vshrl.u32 %v548, 7
        %v550 = vsub.s32 %v547, %v549
        %v551 = vrot.slane %v501, %v550
        %v553 = vunpack.c.l.s4 1983009808
        %v554 = vunpack.c.0.s8 %v553
        %v555 = vlaneseq
        %v556 = vshrl.u32 %v555, 7
        %v557 = vsub.s32 %v554, %v556
        %v558 = vrot.slane %v502, %v557
        %v560 = vunpack.c.l.s4 1983009808
        %v561 = vunpack.c.0.s8 %v560
        %v562 = vlaneseq
        %v563 = vshrl.u32 %v562, 7
        %v564 = vsub.s32 %v561, %v563
        %v565 = vrot.slane %v503, %v564
        %v567 = vunpack.c.l.s4 1983009808
        %v568 = vunpack.c.0.s8 %v567
        %v569 = vlaneseq
        %v570 = vshrl.u32 %v569, 7
        %v571 = vsub.s32 %v568, %v570
        %v572 = vrot.slane %v504, %v571
        %v574 = vunpack.c.l.s4 1983009808
        %v575 = vunpack.c.0.s8 %v574
        %v576 = vlaneseq
        %v577 = vshrl.u32 %v576, 7
        %v578 = vsub.s32 %v575, %v577
        %v579 = vrot.slane %v505, %v578
        %v581 = vunpack.c.l.s4 1983009808
        %v582 = vunpack.c.0.s8 %v581
        %v583 = vlaneseq
        %v584 = vshrl.u32 %v583, 7
        %v585 = vsub.s32 %v582, %v584
        %v586 = vrot.slane %v506, %v585
        %v587 = vunpack.c.l.b16 %v537
        %v588 = vunpack.c.l.b16 %v544
        %v589 = vunpack.c.l.b16 %v551
        %v590 = vunpack.c.l.b16 %v558
        %v591 = vunpack.c.l.b16 %v565
        %v592 = vunpack.c.l.b16 %v572
        %v593 = vunpack.c.l.b16 %v579
        %v594 = vunpack.c.l.b16 %v586
        %v595 = vrot.slane %v588, 7
        %vm596 = vcmask 1041409
        %v597 = vsel %vm596, %v595, %v587
        %v598 = vrot.slane %v589, 6
        %vm599 = vcmask 1042434
        %v600 = vsel %vm599, %v598, %v597
        %v601 = vrot.slane %v590, 5
        %vm602 = vcmask 1043459
        %v603 = vsel %vm602, %v601, %v600
        %v604 = vrot.slane %v591, 4
        %vm605 = vcmask 1044484
        %v606 = vsel %vm605, %v604, %v603
        %v607 = vrot.slane %v592, 3
        %vm608 = vcmask 1045509
        %v609 = vsel %vm608, %v607, %v606
        %v610 = vrot.slane %v593, 2
        %vm611 = vcmask 1046534
        %v612 = vsel %vm611, %v610, %v609
        %v613 = vrot.slane %v594, 1
        %vm614 = vcmask 1047559
        %v615 = vsel %vm614, %v613, %v612
        %v616 = vpack.c.b16 %v615, %v615
        %v626 = vunpack.c.l.s4 1983009808
        %v627 = vunpack.c.0.s8 %v626
        %v628 = vlaneseq
        %v629 = vshrl.u32 %v628, 7
        %v630 = vsub.s32 %v627, %v629
        %v631 = vrot.slane %v507, %v630
        %v633 = vunpack.c.l.s4 1983009808
        %v634 = vunpack.c.0.s8 %v633
        %v635 = vlaneseq
        %v636 = vshrl.u32 %v635, 7
        %v637 = vsub.s32 %v634, %v636
        %v638 = vrot.slane %v508, %v637
        %v640 = vunpack.c.l.s4 1983009808
        %v641 = vunpack.c.0.s8 %v640
        %v642 = vlaneseq
        %v643 = vshrl.u32 %v642, 7
        %v644 = vsub.s32 %v641, %v643
        %v645 = vrot.slane %v509, %v644
        %v647 = vunpack.c.l.s4 1983009808
        %v648 = vunpack.c.0.s8 %v647
        %v649 = vlaneseq
        %v650 = vshrl.u32 %v649, 7
        %v651 = vsub.s32 %v648, %v650
        %v652 = vrot.slane %v510, %v651
        %v654 = vunpack.c.l.s4 1983009808
        %v655 = vunpack.c.0.s8 %v654
        %v656 = vlaneseq
        %v657 = vshrl.u32 %v656, 7
        %v658 = vsub.s32 %v655, %v657
        %v659 = vrot.slane %v511, %v658
        %v661 = vunpack.c.l.s4 1983009808
        %v662 = vunpack.c.0.s8 %v661
        %v663 = vlaneseq
        %v664 = vshrl.u32 %v663, 7
        %v665 = vsub.s32 %v662, %v664
        %v666 = vrot.slane %v512, %v665
        %v668 = vunpack.c.l.s4 1983009808
        %v669 = vunpack.c.0.s8 %v668
        %v670 = vlaneseq
        %v671 = vshrl.u32 %v670, 7
        %v672 = vsub.s32 %v669, %v671
        %v673 = vrot.slane %v513, %v672
        %v675 = vunpack.c.l.s4 1983009808
        %v676 = vunpack.c.0.s8 %v675
        %v677 = vlaneseq
        %v678 = vshrl.u32 %v677, 7
        %v679 = vsub.s32 %v676, %v678
        %v680 = vrot.slane %v514, %v679
        %v681 = vunpack.c.l.b16 %v631
        %v682 = vunpack.c.l.b16 %v638
        %v683 = vunpack.c.l.b16 %v645
        %v684 = vunpack.c.l.b16 %v652
        %v685 = vunpack.c.l.b16 %v659
        %v686 = vunpack.c.l.b16 %v666
        %v687 = vunpack.c.l.b16 %v673
        %v688 = vunpack.c.l.b16 %v680
        %v689 = vrot.slane %v682, 7
        %v690 = vsel %vm596, %v689, %v681
        %v691 = vrot.slane %v683, 6
        %v692 = vsel %vm599, %v691, %v690
        %v693 = vrot.slane %v684, 5
        %v694 = vsel %vm602, %v693, %v692
        %v695 = vrot.slane %v685, 4
        %v696 = vsel %vm605, %v695, %v694
        %v697 = vrot.slane %v686, 3
        %v698 = vsel %vm608, %v697, %v696
        %v699 = vrot.slane %v687, 2
        %v700 = vsel %vm611, %v699, %v698
        %v701 = vrot.slane %v688, 1
        %v702 = vsel %vm614, %v701, %v700
        %v703 = vpack.c.b16 %v702, %v702
        %v705 = vsel %vm489, %v616, 0
        %v708 = vsel %vm489, %v703, 0
        %710 = vmatprep.subr.bf16.mxu0 0
        %711 = vmatpush1.bf16.xpose.msra.mxu0 %v708
        %712 = vmatprep.subr.bf16.mxu0 0
        %713 = vmatpush1.bf16.xpose.msra.mxu0 0
        %714 = vmatprep.subr.bf16.mxu0 0
        %715 = vmatpush1.bf16.xpose.msra.mxu0 0
        %716 = vmatprep.subr.bf16.mxu0 0
        %717 = vmatpush1.bf16.xpose.msra.mxu0 0
        %718 = vmatprep.subr.bf16.mxu0 0
        %719 = vmatpush1.bf16.xpose.msra.mxu0 0
        %720 = vmatprep.subr.bf16.mxu0 0
        %721 = vmatpush1.bf16.xpose.msra.mxu0 0
        %722 = vmatprep.subr.bf16.mxu0 0
        %723 = vmatpush1.bf16.xpose.msra.mxu0 0
        %724 = vmatprep.subr.bf16.mxu0 0
        %725 = vmatpush1.bf16.xpose.msra.mxu0 0
        %726 = vmatprep.subr.bf16.mxu0 0
        %727 = vmatpush1.bf16.xpose.msra.mxu0 0
        %728 = vmatprep.subr.bf16.mxu0 0
        %729 = vmatpush1.bf16.xpose.msra.mxu0 0
        %730 = vmatprep.subr.bf16.mxu0 0
        %731 = vmatpush1.bf16.xpose.msra.mxu0 0
        %732 = vmatprep.subr.bf16.mxu0 0
        %733 = vmatpush1.bf16.xpose.msra.mxu0 0
        %734 = vmatprep.subr.bf16.mxu0 0
        %735 = vmatpush1.bf16.xpose.msra.mxu0 0
        %736 = vmatprep.subr.bf16.mxu0 0
        %737 = vmatpush1.bf16.xpose.msra.mxu0 0
        %738 = vmatprep.subr.bf16.mxu0 0
        %739 = vmatpush1.bf16.xpose.msra.mxu0 0
        %740 = vmatprep.subr.bf16.mxu0 0
        %741 = vmatpush1.bf16.xpose.msra.mxu0 0
        %742 = vmatprep.mubr.bf16.mxu0 0
        %743 = vmatmul.mubr.bf16.gmra.mrb[0].mxu0 %v705
        %v744 = vpop.f32.mrb[0].mxu0
        %v745 = vadd.f32 0.0, %v744
        %v746 = vpop.f32.mrb[0].mxu0
        %v747 = vpop.f32.mrb[0].mxu0
        %v748 = vpop.f32.mrb[0].mxu0
        %749 = vdwg.mxu0
        %v750 = vsel %vm489, %v745, -inf
        %751 = vmax.xlane.f32.xlu0 %v750
        %v752 = vpop.xlane.xlu0 %751
        %v753 = vsub.f32 %v745, %v752
        %v754 = vmul.f32 %v753, 1.442695
        %v755 = vpow.pop %v754
        %v756 = vsel %vm489, %v755, 0.0
        %757 = vadd.xlane.f32.xlu0 %v756
        %v758 = vpop.xlane.xlu0 %757
        %v759 = vrcp.pop %v758
        %v760 = vpack.c.bf16 %v755, %v755
        %v770 = vunpack.c.l.s4 1983009808
        %v771 = vunpack.c.0.s8 %v770
        %v772 = vlaneseq
        %v773 = vshrl.u32 %v772, 7
        %v774 = vsub.s32 %v771, %v773
        %v775 = vrot.slane %v515, %v774
        %v777 = vunpack.c.l.s4 1983009808
        %v778 = vunpack.c.0.s8 %v777
        %v779 = vlaneseq
        %v780 = vshrl.u32 %v779, 7
        %v781 = vsub.s32 %v778, %v780
        %v782 = vrot.slane %v516, %v781
        %v784 = vunpack.c.l.s4 1983009808
        %v785 = vunpack.c.0.s8 %v784
        %v786 = vlaneseq
        %v787 = vshrl.u32 %v786, 7
        %v788 = vsub.s32 %v785, %v787
        %v789 = vrot.slane %v517, %v788
        %v791 = vunpack.c.l.s4 1983009808
        %v792 = vunpack.c.0.s8 %v791
        %v793 = vlaneseq
        %v794 = vshrl.u32 %v793, 7
        %v795 = vsub.s32 %v792, %v794
        %v796 = vrot.slane %v518, %v795
        %v798 = vunpack.c.l.s4 1983009808
        %v799 = vunpack.c.0.s8 %v798
        %v800 = vlaneseq
        %v801 = vshrl.u32 %v800, 7
        %v802 = vsub.s32 %v799, %v801
        %v803 = vrot.slane %v519, %v802
        %v805 = vunpack.c.l.s4 1983009808
        %v806 = vunpack.c.0.s8 %v805
        %v807 = vlaneseq
        %v808 = vshrl.u32 %v807, 7
        %v809 = vsub.s32 %v806, %v808
        %v810 = vrot.slane %v520, %v809
        %v812 = vunpack.c.l.s4 1983009808
        %v813 = vunpack.c.0.s8 %v812
        %v814 = vlaneseq
        %v815 = vshrl.u32 %v814, 7
        %v816 = vsub.s32 %v813, %v815
        %v817 = vrot.slane %v521, %v816
        %v819 = vunpack.c.l.s4 1983009808
        %v820 = vunpack.c.0.s8 %v819
        %v821 = vlaneseq
        %v822 = vshrl.u32 %v821, 7
        %v823 = vsub.s32 %v820, %v822
        %v824 = vrot.slane %v522, %v823
        %v825 = vunpack.c.l.b16 %v775
        %v826 = vunpack.c.l.b16 %v782
        %v827 = vunpack.c.l.b16 %v789
        %v828 = vunpack.c.l.b16 %v796
        %v829 = vunpack.c.l.b16 %v803
        %v830 = vunpack.c.l.b16 %v810
        %v831 = vunpack.c.l.b16 %v817
        %v832 = vunpack.c.l.b16 %v824
        %v833 = vrot.slane %v826, 7
        %v834 = vsel %vm596, %v833, %v825
        %v835 = vrot.slane %v827, 6
        %v836 = vsel %vm599, %v835, %v834
        %v837 = vrot.slane %v828, 5
        %v838 = vsel %vm602, %v837, %v836
        %v839 = vrot.slane %v829, 4
        %v840 = vsel %vm605, %v839, %v838
        %v841 = vrot.slane %v830, 3
        %v842 = vsel %vm608, %v841, %v840
        %v843 = vrot.slane %v831, 2
        %v844 = vsel %vm611, %v843, %v842
        %v845 = vrot.slane %v832, 1
        %v846 = vsel %vm614, %v845, %v844
        %v847 = vpack.c.b16 %v846, %v846
        %v849 = vsel %vm489, %v760, 0
        %vm851 = vcmask 1043456
        %v853 = vsel %vm851, %v847, 0
        %855 = vmatprep.subr.bf16.mxu0 0
        %856 = vmatpush1.bf16.msra.mxu0 %v853
        %857 = vmatprep.subr.bf16.mxu0 0
        %858 = vmatpush1.bf16.msra.mxu0 0
        %859 = vmatprep.subr.bf16.mxu0 0
        %860 = vmatpush1.bf16.msra.mxu0 0
        %861 = vmatprep.subr.bf16.mxu0 0
        %862 = vmatpush1.bf16.msra.mxu0 0
        %863 = vmatprep.subr.bf16.mxu0 0
        %864 = vmatpush1.bf16.msra.mxu0 0
        %865 = vmatprep.subr.bf16.mxu0 0
        %866 = vmatpush1.bf16.msra.mxu0 0
        %867 = vmatprep.subr.bf16.mxu0 0
        %868 = vmatpush1.bf16.msra.mxu0 0
        %869 = vmatprep.subr.bf16.mxu0 0
        %870 = vmatpush1.bf16.msra.mxu0 0
        %871 = vmatprep.subr.bf16.mxu0 0
        %872 = vmatpush1.bf16.msra.mxu0 0
        %873 = vmatprep.subr.bf16.mxu0 0
        %874 = vmatpush1.bf16.msra.mxu0 0
        %875 = vmatprep.subr.bf16.mxu0 0
        %876 = vmatpush1.bf16.msra.mxu0 0
        %877 = vmatprep.subr.bf16.mxu0 0
        %878 = vmatpush1.bf16.msra.mxu0 0
        %879 = vmatprep.subr.bf16.mxu0 0
        %880 = vmatpush1.bf16.msra.mxu0 0
        %881 = vmatprep.subr.bf16.mxu0 0
        %882 = vmatpush1.bf16.msra.mxu0 0
        %883 = vmatprep.subr.bf16.mxu0 0
        %884 = vmatpush1.bf16.msra.mxu0 0
        %885 = vmatprep.subr.bf16.mxu0 0
        %886 = vmatpush1.bf16.msra.mxu0 0
        %887 = vmatprep.mubr.bf16.mxu0 0
        %888 = vmatmul.mubr.bf16.gmra.mrb[0].mxu0 %v849
        %v889 = vpop.f32.mrb[0].mxu0
        %v890 = vadd.f32 0.0, %v889
        %v891 = vpop.f32.mrb[0].mxu0
        %v892 = vpop.f32.mrb[0].mxu0
        %v893 = vpop.f32.mrb[0].mxu0
        %894 = vdwg.mxu0
        %v895 = vmul.f32 %v890, %v759
        %v896 = vpack.c.bf16 %v895, %v895
        %vm897 = vcmask 60416
        %898 = vst.msk [vmem:[%s486] sm:$0xf] %vm897, %v896
        %v899 = vld [vmem:[%s478] sm:$0xff]
        %v900 = vmul.f32 %v755, %v759
        %v901 = vadd.f32 %v899, %v900
        %902 = vst.msk [vmem:[%s478] sm:$0xff] %vm489, %v901
        %v903 = vld [vmem:[%s427] sm:$0x1]
        %v904 = vld [vmem:[%s427 + $0x2] sm:$0x1]
        %v905 = vld [vmem:[%s427 + $0x4] sm:$0x1]
        %v906 = vld [vmem:[%s427 + $0x6] sm:$0x1]
        %v907 = vld [vmem:[%s427 + $0x8] sm:$0x1]
        %v908 = vld [vmem:[%s427 + $0xa] sm:$0x1]
        %v909 = vld [vmem:[%s427 + $0xc] sm:$0x1]
        %v910 = vld [vmem:[%s427 + $0xe] sm:$0x1]
        %v911 = vmul.bf16 %v903, 1052065461
        %v912 = vmul.bf16 %v904, 1052065461
        %v913 = vmul.bf16 %v905, 1052065461
        %v914 = vmul.bf16 %v906, 1052065461
        %v915 = vmul.bf16 %v907, 1052065461
        %v916 = vmul.bf16 %v908, 1052065461
        %v917 = vmul.bf16 %v909, 1052065461
        %v918 = vmul.bf16 %v910, 1052065461
        %v919 = vld [vmem:[%s434] sm:$0x1]
        %v920 = vld [vmem:[%s434 + $0x2] sm:$0x1]
        %v921 = vld [vmem:[%s434 + $0x4] sm:$0x1]
        %v922 = vld [vmem:[%s434 + $0x6] sm:$0x1]
        %v923 = vld [vmem:[%s434 + $0x8] sm:$0x1]
        %v924 = vld [vmem:[%s434 + $0xa] sm:$0x1]
        %v925 = vld [vmem:[%s434 + $0xc] sm:$0x1]
        %v926 = vld [vmem:[%s434 + $0xe] sm:$0x1]
        %v927 = vld [vmem:[%s441] sm:$0x1]
        %v928 = vld [vmem:[%s441 + $0x2] sm:$0x1]
        %v929 = vld [vmem:[%s441 + $0x4] sm:$0x1]
        %v930 = vld [vmem:[%s441 + $0x6] sm:$0x1]
        %v931 = vld [vmem:[%s441 + $0x8] sm:$0x1]
        %v932 = vld [vmem:[%s441 + $0xa] sm:$0x1]
        %v933 = vld [vmem:[%s441 + $0xc] sm:$0x1]
        %v934 = vld [vmem:[%s441 + $0xe] sm:$0x1]
        %v944 = vunpack.c.l.s4 1983009808
        %v945 = vunpack.c.0.s8 %v944
        %v946 = vlaneseq
        %v947 = vshrl.u32 %v946, 7
        %v948 = vsub.s32 %v945, %v947
        %v949 = vrot.slane %v911, %v948
        %v951 = vunpack.c.l.s4 1983009808
        %v952 = vunpack.c.0.s8 %v951
        %v953 = vlaneseq
        %v954 = vshrl.u32 %v953, 7
        %v955 = vsub.s32 %v952, %v954
        %v956 = vrot.slane %v912, %v955
        %v958 = vunpack.c.l.s4 1983009808
        %v959 = vunpack.c.0.s8 %v958
        %v960 = vlaneseq
        %v961 = vshrl.u32 %v960, 7
        %v962 = vsub.s32 %v959, %v961
        %v963 = vrot.slane %v913, %v962
        %v965 = vunpack.c.l.s4 1983009808
        %v966 = vunpack.c.0.s8 %v965
        %v967 = vlaneseq
        %v968 = vshrl.u32 %v967, 7
        %v969 = vsub.s32 %v966, %v968
        %v970 = vrot.slane %v914, %v969
        %v972 = vunpack.c.l.s4 1983009808
        %v973 = vunpack.c.0.s8 %v972
        %v974 = vlaneseq
        %v975 = vshrl.u32 %v974, 7
        %v976 = vsub.s32 %v973, %v975
        %v977 = vrot.slane %v915, %v976
        %v979 = vunpack.c.l.s4 1983009808
        %v980 = vunpack.c.0.s8 %v979
        %v981 = vlaneseq
        %v982 = vshrl.u32 %v981, 7
        %v983 = vsub.s32 %v980, %v982
        %v984 = vrot.slane %v916, %v983
        %v986 = vunpack.c.l.s4 1983009808
        %v987 = vunpack.c.0.s8 %v986
        %v988 = vlaneseq
        %v989 = vshrl.u32 %v988, 7
        %v990 = vsub.s32 %v987, %v989
        %v991 = vrot.slane %v917, %v990
        %v993 = vunpack.c.l.s4 1983009808
        %v994 = vunpack.c.0.s8 %v993
        %v995 = vlaneseq
        %v996 = vshrl.u32 %v995, 7
        %v997 = vsub.s32 %v994, %v996
        %v998 = vrot.slane %v918, %v997
        %v999 = vunpack.c.l.b16 %v949
        %v1000 = vunpack.c.l.b16 %v956
        %v1001 = vunpack.c.l.b16 %v963
        %v1002 = vunpack.c.l.b16 %v970
        %v1003 = vunpack.c.l.b16 %v977
        %v1004 = vunpack.c.l.b16 %v984
        %v1005 = vunpack.c.l.b16 %v991
        %v1006 = vunpack.c.l.b16 %v998
        %v1007 = vrot.slane %v999, 1
        %v1008 = vsel %vm596, %v1000, %v1007
        %v1009 = vrot.slane %v1001, 7
        %v1010 = vsel %vm599, %v1009, %v1008
        %v1011 = vrot.slane %v1002, 6
        %v1012 = vsel %vm602, %v1011, %v1010
        %v1013 = vrot.slane %v1003, 5
        %v1014 = vsel %vm605, %v1013, %v1012
        %v1015 = vrot.slane %v1004, 4
        %v1016 = vsel %vm608, %v1015, %v1014
        %v1017 = vrot.slane %v1005, 3
        %v1018 = vsel %vm611, %v1017, %v1016
        %v1019 = vrot.slane %v1006, 2
        %v1020 = vsel %vm614, %v1019, %v1018
        %v1021 = vpack.c.b16 %v1020, %v1020
        %v1031 = vunpack.c.l.s4 1983009808
        %v1032 = vunpack.c.0.s8 %v1031
        %v1033 = vlaneseq
        %v1034 = vshrl.u32 %v1033, 7
        %v1035 = vsub.s32 %v1032, %v1034
        %v1036 = vrot.slane %v919, %v1035
        %v1038 = vunpack.c.l.s4 1983009808
        %v1039 = vunpack.c.0.s8 %v1038
        %v1040 = vlaneseq
        %v1041 = vshrl.u32 %v1040, 7
        %v1042 = vsub.s32 %v1039, %v1041
        %v1043 = vrot.slane %v920, %v1042
        %v1045 = vunpack.c.l.s4 1983009808
        %v1046 = vunpack.c.0.s8 %v1045
        %v1047 = vlaneseq
        %v1048 = vshrl.u32 %v1047, 7
        %v1049 = vsub.s32 %v1046, %v1048
        %v1050 = vrot.slane %v921, %v1049
        %v1052 = vunpack.c.l.s4 1983009808
        %v1053 = vunpack.c.0.s8 %v1052
        %v1054 = vlaneseq
        %v1055 = vshrl.u32 %v1054, 7
        %v1056 = vsub.s32 %v1053, %v1055
        %v1057 = vrot.slane %v922, %v1056
        %v1059 = vunpack.c.l.s4 1983009808
        %v1060 = vunpack.c.0.s8 %v1059
        %v1061 = vlaneseq
        %v1062 = vshrl.u32 %v1061, 7
        %v1063 = vsub.s32 %v1060, %v1062
        %v1064 = vrot.slane %v923, %v1063
        %v1066 = vunpack.c.l.s4 1983009808
        %v1067 = vunpack.c.0.s8 %v1066
        %v1068 = vlaneseq
        %v1069 = vshrl.u32 %v1068, 7
        %v1070 = vsub.s32 %v1067, %v1069
        %v1071 = vrot.slane %v924, %v1070
        %v1073 = vunpack.c.l.s4 1983009808
        %v1074 = vunpack.c.0.s8 %v1073
        %v1075 = vlaneseq
        %v1076 = vshrl.u32 %v1075, 7
        %v1077 = vsub.s32 %v1074, %v1076
        %v1078 = vrot.slane %v925, %v1077
        %v1080 = vunpack.c.l.s4 1983009808
        %v1081 = vunpack.c.0.s8 %v1080
        %v1082 = vlaneseq
        %v1083 = vshrl.u32 %v1082, 7
        %v1084 = vsub.s32 %v1081, %v1083
        %v1085 = vrot.slane %v926, %v1084
        %v1086 = vunpack.c.l.b16 %v1036
        %v1087 = vunpack.c.l.b16 %v1043
        %v1088 = vunpack.c.l.b16 %v1050
        %v1089 = vunpack.c.l.b16 %v1057
        %v1090 = vunpack.c.l.b16 %v1064
        %v1091 = vunpack.c.l.b16 %v1071
        %v1092 = vunpack.c.l.b16 %v1078
        %v1093 = vunpack.c.l.b16 %v1085
        %v1094 = vrot.slane %v1086, 1
        %v1095 = vsel %vm596, %v1087, %v1094
        %v1096 = vrot.slane %v1088, 7
        %v1097 = vsel %vm599, %v1096, %v1095
        %v1098 = vrot.slane %v1089, 6
        %v1099 = vsel %vm602, %v1098, %v1097
        %v1100 = vrot.slane %v1090, 5
        %v1101 = vsel %vm605, %v1100, %v1099
        %v1102 = vrot.slane %v1091, 4
        %v1103 = vsel %vm608, %v1102, %v1101
        %v1104 = vrot.slane %v1092, 3
        %v1105 = vsel %vm611, %v1104, %v1103
        %v1106 = vrot.slane %v1093, 2
        %v1107 = vsel %vm614, %v1106, %v1105
        %v1108 = vpack.c.b16 %v1107, %v1107
        %v1110 = vsel %vm489, %v1021, 0
        %v1113 = vsel %vm489, %v1108, 0
        %1115 = vmatprep.subr.bf16.mxu0 0
        %1116 = vmatpush1.bf16.xpose.msra.mxu0 %v1113
        %1117 = vmatprep.subr.bf16.mxu0 0
        %1118 = vmatpush1.bf16.xpose.msra.mxu0 0
        %1119 = vmatprep.subr.bf16.mxu0 0
        %1120 = vmatpush1.bf16.xpose.msra.mxu0 0
        %1121 = vmatprep.subr.bf16.mxu0 0
        %1122 = vmatpush1.bf16.xpose.msra.mxu0 0
        %1123 = vmatprep.subr.bf16.mxu0 0
        %1124 = vmatpush1.bf16.xpose.msra.mxu0 0
        %1125 = vmatprep.subr.bf16.mxu0 0
        %1126 = vmatpush1.bf16.xpose.msra.mxu0 0
        %1127 = vmatprep.subr.bf16.mxu0 0
        %1128 = vmatpush1.bf16.xpose.msra.mxu0 0
        %1129 = vmatprep.subr.bf16.mxu0 0
        %1130 = vmatpush1.bf16.xpose.msra.mxu0 0
        %1131 = vmatprep.subr.bf16.mxu0 0
        %1132 = vmatpush1.bf16.xpose.msra.mxu0 0
        %1133 = vmatprep.subr.bf16.mxu0 0
        %1134 = vmatpush1.bf16.xpose.msra.mxu0 0
        %1135 = vmatprep.subr.bf16.mxu0 0
        %1136 = vmatpush1.bf16.xpose.msra.mxu0 0
        %1137 = vmatprep.subr.bf16.mxu0 0
        %1138 = vmatpush1.bf16.xpose.msra.mxu0 0
        %1139 = vmatprep.subr.bf16.mxu0 0
        %1140 = vmatpush1.bf16.xpose.msra.mxu0 0
        %1141 = vmatprep.subr.bf16.mxu0 0
        %1142 = vmatpush1.bf16.xpose.msra.mxu0 0
        %1143 = vmatprep.subr.bf16.mxu0 0
        %1144 = vmatpush1.bf16.xpose.msra.mxu0 0
        %1145 = vmatprep.subr.bf16.mxu0 0
        %1146 = vmatpush1.bf16.xpose.msra.mxu0 0
        %1147 = vmatprep.mubr.bf16.mxu0 0
        %1148 = vmatmul.mubr.bf16.gmra.mrb[0].mxu0 %v1110
        %v1149 = vpop.f32.mrb[0].mxu0
        %v1150 = vadd.f32 0.0, %v1149
        %v1151 = vpop.f32.mrb[0].mxu0
        %v1152 = vpop.f32.mrb[0].mxu0
        %v1153 = vpop.f32.mrb[0].mxu0
        %1154 = vdwg.mxu0
        %v1155 = vsel %vm489, %v1150, -inf
        %1156 = vmax.xlane.f32.xlu0 %v1155
        %v1157 = vpop.xlane.xlu0 %1156
        %v1158 = vsub.f32 %v1150, %v1157
        %v1159 = vmul.f32 %v1158, 1.442695
        %v1160 = vpow.pop %v1159
        %v1161 = vsel %vm489, %v1160, 0.0
        %1162 = vadd.xlane.f32.xlu0 %v1161
        %v1163 = vpop.xlane.xlu0 %1162
        %v1164 = vrcp.pop %v1163
        %v1165 = vpack.c.bf16 %v1160, %v1160
        %v1175 = vunpack.c.l.s4 1983009808
        %v1176 = vunpack.c.0.s8 %v1175
        %v1177 = vlaneseq
        %v1178 = vshrl.u32 %v1177, 7
        %v1179 = vsub.s32 %v1176, %v1178
        %v1180 = vrot.slane %v927, %v1179
        %v1182 = vunpack.c.l.s4 1983009808
        %v1183 = vunpack.c.0.s8 %v1182
        %v1184 = vlaneseq
        %v1185 = vshrl.u32 %v1184, 7
        %v1186 = vsub.s32 %v1183, %v1185
        %v1187 = vrot.slane %v928, %v1186
        %v1189 = vunpack.c.l.s4 1983009808
        %v1190 = vunpack.c.0.s8 %v1189
        %v1191 = vlaneseq
        %v1192 = vshrl.u32 %v1191, 7
        %v1193 = vsub.s32 %v1190, %v1192
        %v1194 = vrot.slane %v929, %v1193
        %v1196 = vunpack.c.l.s4 1983009808
        %v1197 = vunpack.c.0.s8 %v1196
        %v1198 = vlaneseq
        %v1199 = vshrl.u32 %v1198, 7
        %v1200 = vsub.s32 %v1197, %v1199
        %v1201 = vrot.slane %v930, %v1200
        %v1203 = vunpack.c.l.s4 1983009808
        %v1204 = vunpack.c.0.s8 %v1203
        %v1205 = vlaneseq
        %v1206 = vshrl.u32 %v1205, 7
        %v1207 = vsub.s32 %v1204, %v1206
        %v1208 = vrot.slane %v931, %v1207
        %v1210 = vunpack.c.l.s4 1983009808
        %v1211 = vunpack.c.0.s8 %v1210
        %v1212 = vlaneseq
        %v1213 = vshrl.u32 %v1212, 7
        %v1214 = vsub.s32 %v1211, %v1213
        %v1215 = vrot.slane %v932, %v1214
        %v1217 = vunpack.c.l.s4 1983009808
        %v1218 = vunpack.c.0.s8 %v1217
        %v1219 = vlaneseq
        %v1220 = vshrl.u32 %v1219, 7
        %v1221 = vsub.s32 %v1218, %v1220
        %v1222 = vrot.slane %v933, %v1221
        %v1224 = vunpack.c.l.s4 1983009808
        %v1225 = vunpack.c.0.s8 %v1224
        %v1226 = vlaneseq
        %v1227 = vshrl.u32 %v1226, 7
        %v1228 = vsub.s32 %v1225, %v1227
        %v1229 = vrot.slane %v934, %v1228
        %v1230 = vunpack.c.l.b16 %v1180
        %v1231 = vunpack.c.l.b16 %v1187
        %v1232 = vunpack.c.l.b16 %v1194
        %v1233 = vunpack.c.l.b16 %v1201
        %v1234 = vunpack.c.l.b16 %v1208
        %v1235 = vunpack.c.l.b16 %v1215
        %v1236 = vunpack.c.l.b16 %v1222
        %v1237 = vunpack.c.l.b16 %v1229
        %v1238 = vrot.slane %v1230, 1
        %v1239 = vsel %vm596, %v1231, %v1238
        %v1240 = vrot.slane %v1232, 7
        %v1241 = vsel %vm599, %v1240, %v1239
        %v1242 = vrot.slane %v1233, 6
        %v1243 = vsel %vm602, %v1242, %v1241
        %v1244 = vrot.slane %v1234, 5
        %v1245 = vsel %vm605, %v1244, %v1243
        %v1246 = vrot.slane %v1235, 4
        %v1247 = vsel %vm608, %v1246, %v1245
        %v1248 = vrot.slane %v1236, 3
        %v1249 = vsel %vm611, %v1248, %v1247
        %v1250 = vrot.slane %v1237, 2
        %v1251 = vsel %vm614, %v1250, %v1249
        %v1252 = vpack.c.b16 %v1251, %v1251
        %v1254 = vsel %vm489, %v1165, 0
        %v1257 = vsel %vm851, %v1252, 0
        %1259 = vmatprep.subr.bf16.mxu0 0
        %1260 = vmatpush1.bf16.msra.mxu0 %v1257
        %1261 = vmatprep.subr.bf16.mxu0 0
        %1262 = vmatpush1.bf16.msra.mxu0 0
        %1263 = vmatprep.subr.bf16.mxu0 0
        %1264 = vmatpush1.bf16.msra.mxu0 0
        %1265 = vmatprep.subr.bf16.mxu0 0
        %1266 = vmatpush1.bf16.msra.mxu0 0
        %1267 = vmatprep.subr.bf16.mxu0 0
        %1268 = vmatpush1.bf16.msra.mxu0 0
        %1269 = vmatprep.subr.bf16.mxu0 0
        %1270 = vmatpush1.bf16.msra.mxu0 0
        %1271 = vmatprep.subr.bf16.mxu0 0
        %1272 = vmatpush1.bf16.msra.mxu0 0
        %1273 = vmatprep.subr.bf16.mxu0 0
        %1274 = vmatpush1.bf16.msra.mxu0 0
        %1275 = vmatprep.subr.bf16.mxu0 0
        %1276 = vmatpush1.bf16.msra.mxu0 0
        %1277 = vmatprep.subr.bf16.mxu0 0
        %1278 = vmatpush1.bf16.msra.mxu0 0
        %1279 = vmatprep.subr.bf16.mxu0 0
        %1280 = vmatpush1.bf16.msra.mxu0 0
        %1281 = vmatprep.subr.bf16.mxu0 0
        %1282 = vmatpush1.bf16.msra.mxu0 0
        %1283 = vmatprep.subr.bf16.mxu0 0
        %1284 = vmatpush1.bf16.msra.mxu0 0
        %1285 = vmatprep.subr.bf16.mxu0 0
        %1286 = vmatpush1.bf16.msra.mxu0 0
        %1287 = vmatprep.subr.bf16.mxu0 0
        %1288 = vmatpush1.bf16.msra.mxu0 0
        %1289 = vmatprep.subr.bf16.mxu0 0
        %1290 = vmatpush1.bf16.msra.mxu0 0
        %1291 = vmatprep.mubr.bf16.mxu0 0
        %1292 = vmatmul.mubr.bf16.gmra.mrb[0].mxu0 %v1254
        %v1293 = vpop.f32.mrb[0].mxu0
        %v1294 = vadd.f32 0.0, %v1293
        %v1295 = vpop.f32.mrb[0].mxu0
        %v1296 = vpop.f32.mrb[0].mxu0
        %v1297 = vpop.f32.mrb[0].mxu0
        %1298 = vdwg.mxu0
        %v1299 = vmul.f32 %v1294, %v1164
        %v1300 = vpack.c.bf16 %v1299, %v1299
        %v1302 = vunpack.c.l.b16 %v1300
        %v1303 = vpack.c.b16 %v1302, %v1302
        %1304 = vrot.lane.b32.xlu0 %v1303, 8
        %v1305 = vpop.permute.xlu0 %1304
        %vm1307 = vcmask 126016
        %1308 = vst.msk [vmem:[%s486] sm:$0xf] %vm1307, %v1305
        %v1309 = vld [vmem:[%s478] sm:$0xff]
        %v1310 = vmul.f32 %v1160, %v1164
        %v1311 = vadd.f32 %v1309, %v1310
        %1312 = vst.msk [vmem:[%s478] sm:$0xff] %vm489, %v1311
        %v1313 = vld [vmem:[%s427] sm:$0x2]
        %v1314 = vld [vmem:[%s427 + $0x2] sm:$0x2]
        %v1315 = vld [vmem:[%s427 + $0x4] sm:$0x2]
        %v1316 = vld [vmem:[%s427 + $0x6] sm:$0x2]
        %v1317 = vld [vmem:[%s427 + $0x8] sm:$0x2]
        %v1318 = vld [vmem:[%s427 + $0xa] sm:$0x2]
        %v1319 = vld [vmem:[%s427 + $0xc] sm:$0x2]
        %v1320 = vld [vmem:[%s427 + $0xe] sm:$0x2]
        %v1321 = vmul.bf16 %v1313, 1052065461
        %v1322 = vmul.bf16 %v1314, 1052065461
        %v1323 = vmul.bf16 %v1315, 1052065461
        %v1324 = vmul.bf16 %v1316, 1052065461
        %v1325 = vmul.bf16 %v1317, 1052065461
        %v1326 = vmul.bf16 %v1318, 1052065461
        %v1327 = vmul.bf16 %v1319, 1052065461
        %v1328 = vmul.bf16 %v1320, 1052065461
        %v1329 = vld [vmem:[%s434] sm:$0x2]
        %v1330 = vld [vmem:[%s434 + $0x2] sm:$0x2]
        %v1331 = vld [vmem:[%s434 + $0x4] sm:$0x2]
        %v1332 = vld [vmem:[%s434 + $0x6] sm:$0x2]
        %v1333 = vld [vmem:[%s434 + $0x8] sm:$0x2]
        %v1334 = vld [vmem:[%s434 + $0xa] sm:$0x2]
        %v1335 = vld [vmem:[%s434 + $0xc] sm:$0x2]
        %v1336 = vld [vmem:[%s434 + $0xe] sm:$0x2]
        %v1337 = vld [vmem:[%s441] sm:$0x2]
        %v1338 = vld [vmem:[%s441 + $0x2] sm:$0x2]
        %v1339 = vld [vmem:[%s441 + $0x4] sm:$0x2]
        %v1340 = vld [vmem:[%s441 + $0x6] sm:$0x2]
        %v1341 = vld [vmem:[%s441 + $0x8] sm:$0x2]
        %v1342 = vld [vmem:[%s441 + $0xa] sm:$0x2]
        %v1343 = vld [vmem:[%s441 + $0xc] sm:$0x2]
        %v1344 = vld [vmem:[%s441 + $0xe] sm:$0x2]
        %v1354 = vunpack.c.l.s4 1983009808
        %v1355 = vunpack.c.0.s8 %v1354
        %v1356 = vlaneseq
        %v1357 = vshrl.u32 %v1356, 7
        %v1358 = vsub.s32 %v1355, %v1357
        %v1359 = vrot.slane %v1321, %v1358
        %v1361 = vunpack.c.l.s4 1983009808
        %v1362 = vunpack.c.0.s8 %v1361
        %v1363 = vlaneseq
        %v1364 = vshrl.u32 %v1363, 7
        %v1365 = vsub.s32 %v1362, %v1364
        %v1366 = vrot.slane %v1322, %v1365
        %v1368 = vunpack.c.l.s4 1983009808
        %v1369 = vunpack.c.0.s8 %v1368
        %v1370 = vlaneseq
        %v1371 = vshrl.u32 %v1370, 7
        %v1372 = vsub.s32 %v1369, %v1371
        %v1373 = vrot.slane %v1323, %v1372
        %v1375 = vunpack.c.l.s4 1983009808
        %v1376 = vunpack.c.0.s8 %v1375
        %v1377 = vlaneseq
        %v1378 = vshrl.u32 %v1377, 7
        %v1379 = vsub.s32 %v1376, %v1378
        %v1380 = vrot.slane %v1324, %v1379
        %v1382 = vunpack.c.l.s4 1983009808
        %v1383 = vunpack.c.0.s8 %v1382
        %v1384 = vlaneseq
        %v1385 = vshrl.u32 %v1384, 7
        %v1386 = vsub.s32 %v1383, %v1385
        %v1387 = vrot.slane %v1325, %v1386
        %v1389 = vunpack.c.l.s4 1983009808
        %v1390 = vunpack.c.0.s8 %v1389
        %v1391 = vlaneseq
        %v1392 = vshrl.u32 %v1391, 7
        %v1393 = vsub.s32 %v1390, %v1392
        %v1394 = vrot.slane %v1326, %v1393
        %v1396 = vunpack.c.l.s4 1983009808
        %v1397 = vunpack.c.0.s8 %v1396
        %v1398 = vlaneseq
        %v1399 = vshrl.u32 %v1398, 7
        %v1400 = vsub.s32 %v1397, %v1399
        %v1401 = vrot.slane %v1327, %v1400
        %v1403 = vunpack.c.l.s4 1983009808
        %v1404 = vunpack.c.0.s8 %v1403
        %v1405 = vlaneseq
        %v1406 = vshrl.u32 %v1405, 7
        %v1407 = vsub.s32 %v1404, %v1406
        %v1408 = vrot.slane %v1328, %v1407
        %v1409 = vunpack.c.l.b16 %v1359
        %v1410 = vunpack.c.l.b16 %v1366
        %v1411 = vunpack.c.l.b16 %v1373
        %v1412 = vunpack.c.l.b16 %v1380
        %v1413 = vunpack.c.l.b16 %v1387
        %v1414 = vunpack.c.l.b16 %v1394
        %v1415 = vunpack.c.l.b16 %v1401
        %v1416 = vunpack.c.l.b16 %v1408
        %v1417 = vrot.slane %v1409, 2
        %v1418 = vrot.slane %v1410, 1
        %v1419 = vsel %vm596, %v1418, %v1417
        %v1420 = vsel %vm599, %v1411, %v1419
        %v1421 = vrot.slane %v1412, 7
        %v1422 = vsel %vm602, %v1421, %v1420
        %v1423 = vrot.slane %v1413, 6
        %v1424 = vsel %vm605, %v1423, %v1422
        %v1425 = vrot.slane %v1414, 5
        %v1426 = vsel %vm608, %v1425, %v1424
        %v1427 = vrot.slane %v1415, 4
        %v1428 = vsel %vm611, %v1427, %v1426
        %v1429 = vrot.slane %v1416, 3
        %v1430 = vsel %vm614, %v1429, %v1428
        %v1431 = vpack.c.b16 %v1430, %v1430
        %v1441 = vunpack.c.l.s4 1983009808
        %v1442 = vunpack.c.0.s8 %v1441
        %v1443 = vlaneseq
        %v1444 = vshrl.u32 %v1443, 7
        %v1445 = vsub.s32 %v1442, %v1444
        %v1446 = vrot.slane %v1329, %v1445
        %v1448 = vunpack.c.l.s4 1983009808
        %v1449 = vunpack.c.0.s8 %v1448
        %v1450 = vlaneseq
        %v1451 = vshrl.u32 %v1450, 7
        %v1452 = vsub.s32 %v1449, %v1451
        %v1453 = vrot.slane %v1330, %v1452
        %v1455 = vunpack.c.l.s4 1983009808
        %v1456 = vunpack.c.0.s8 %v1455
        %v1457 = vlaneseq
        %v1458 = vshrl.u32 %v1457, 7
        %v1459 = vsub.s32 %v1456, %v1458
        %v1460 = vrot.slane %v1331, %v1459
        %v1462 = vunpack.c.l.s4 1983009808
        %v1463 = vunpack.c.0.s8 %v1462
        %v1464 = vlaneseq
        %v1465 = vshrl.u32 %v1464, 7
        %v1466 = vsub.s32 %v1463, %v1465
        %v1467 = vrot.slane %v1332, %v1466
        %v1469 = vunpack.c.l.s4 1983009808
        %v1470 = vunpack.c.0.s8 %v1469
        %v1471 = vlaneseq
        %v1472 = vshrl.u32 %v1471, 7
        %v1473 = vsub.s32 %v1470, %v1472
        %v1474 = vrot.slane %v1333, %v1473
        %v1476 = vunpack.c.l.s4 1983009808
        %v1477 = vunpack.c.0.s8 %v1476
        %v1478 = vlaneseq
        %v1479 = vshrl.u32 %v1478, 7
        %v1480 = vsub.s32 %v1477, %v1479
        %v1481 = vrot.slane %v1334, %v1480
        %v1483 = vunpack.c.l.s4 1983009808
        %v1484 = vunpack.c.0.s8 %v1483
        %v1485 = vlaneseq
        %v1486 = vshrl.u32 %v1485, 7
        %v1487 = vsub.s32 %v1484, %v1486
        %v1488 = vrot.slane %v1335, %v1487
        %v1490 = vunpack.c.l.s4 1983009808
        %v1491 = vunpack.c.0.s8 %v1490
        %v1492 = vlaneseq
        %v1493 = vshrl.u32 %v1492, 7
        %v1494 = vsub.s32 %v1491, %v1493
        %v1495 = vrot.slane %v1336, %v1494
        %v1496 = vunpack.c.l.b16 %v1446
        %v1497 = vunpack.c.l.b16 %v1453
        %v1498 = vunpack.c.l.b16 %v1460
        %v1499 = vunpack.c.l.b16 %v1467
        %v1500 = vunpack.c.l.b16 %v1474
        %v1501 = vunpack.c.l.b16 %v1481
        %v1502 = vunpack.c.l.b16 %v1488
        %v1503 = vunpack.c.l.b16 %v1495
        %v1504 = vrot.slane %v1496, 2
        %v1505 = vrot.slane %v1497, 1
        %v1506 = vsel %vm596, %v1505, %v1504
        %v1507 = vsel %vm599, %v1498, %v1506
        %v1508 = vrot.slane %v1499, 7
        %v1509 = vsel %vm602, %v1508, %v1507
        %v1510 = vrot.slane %v1500, 6
        %v1511 = vsel %vm605, %v1510, %v1509
        %v1512 = vrot.slane %v1501, 5
        %v1513 = vsel %vm608, %v1512, %v1511
        %v1514 = vrot.slane %v1502, 4
        %v1515 = vsel %vm611, %v1514, %v1513
        %v1516 = vrot.slane %v1503, 3
        %v1517 = vsel %vm614, %v1516, %v1515
        %v1518 = vpack.c.b16 %v1517, %v1517
        %v1520 = vsel %vm489, %v1431, 0
        %v1523 = vsel %vm489, %v1518, 0
        %1525 = vmatprep.subr.bf16.mxu0 0
        %1526 = vmatpush1.bf16.xpose.msra.mxu0 %v1523
        %1527 = vmatprep.subr.bf16.mxu0 0
        %1528 = vmatpush1.bf16.xpose.msra.mxu0 0
        %1529 = vmatprep.subr.bf16.mxu0 0
        %1530 = vmatpush1.bf16.xpose.msra.mxu0 0
        %1531 = vmatprep.subr.bf16.mxu0 0
        %1532 = vmatpush1.bf16.xpose.msra.mxu0 0
        %1533 = vmatprep.subr.bf16.mxu0 0
        %1534 = vmatpush1.bf16.xpose.msra.mxu0 0
        %1535 = vmatprep.subr.bf16.mxu0 0
        %1536 = vmatpush1.bf16.xpose.msra.mxu0 0
        %1537 = vmatprep.subr.bf16.mxu0 0
        %1538 = vmatpush1.bf16.xpose.msra.mxu0 0
        %1539 = vmatprep.subr.bf16.mxu0 0
        %1540 = vmatpush1.bf16.xpose.msra.mxu0 0
        %1541 = vmatprep.subr.bf16.mxu0 0
        %1542 = vmatpush1.bf16.xpose.msra.mxu0 0
        %1543 = vmatprep.subr.bf16.mxu0 0
        %1544 = vmatpush1.bf16.xpose.msra.mxu0 0
        %1545 = vmatprep.subr.bf16.mxu0 0
        %1546 = vmatpush1.bf16.xpose.msra.mxu0 0
        %1547 = vmatprep.subr.bf16.mxu0 0
        %1548 = vmatpush1.bf16.xpose.msra.mxu0 0
        %1549 = vmatprep.subr.bf16.mxu0 0
        %1550 = vmatpush1.bf16.xpose.msra.mxu0 0
        %1551 = vmatprep.subr.bf16.mxu0 0
        %1552 = vmatpush1.bf16.xpose.msra.mxu0 0
        %1553 = vmatprep.subr.bf16.mxu0 0
        %1554 = vmatpush1.bf16.xpose.msra.mxu0 0
        %1555 = vmatprep.subr.bf16.mxu0 0
        %1556 = vmatpush1.bf16.xpose.msra.mxu0 0
        %1557 = vmatprep.mubr.bf16.mxu0 0
        %1558 = vmatmul.mubr.bf16.gmra.mrb[0].mxu0 %v1520
        %v1559 = vpop.f32.mrb[0].mxu0
        %v1560 = vadd.f32 0.0, %v1559
        %v1561 = vpop.f32.mrb[0].mxu0
        %v1562 = vpop.f32.mrb[0].mxu0
        %v1563 = vpop.f32.mrb[0].mxu0
        %1564 = vdwg.mxu0
        %v1565 = vsel %vm489, %v1560, -inf
        %1566 = vmax.xlane.f32.xlu0 %v1565
        %v1567 = vpop.xlane.xlu0 %1566
        %v1568 = vsub.f32 %v1560, %v1567
        %v1569 = vmul.f32 %v1568, 1.442695
        %v1570 = vpow.pop %v1569
        %v1571 = vsel %vm489, %v1570, 0.0
        %1572 = vadd.xlane.f32.xlu0 %v1571
        %v1573 = vpop.xlane.xlu0 %1572
        %v1574 = vrcp.pop %v1573
        %v1575 = vpack.c.bf16 %v1570, %v1570
        %v1585 = vunpack.c.l.s4 1983009808
        %v1586 = vunpack.c.0.s8 %v1585
        %v1587 = vlaneseq
        %v1588 = vshrl.u32 %v1587, 7
        %v1589 = vsub.s32 %v1586, %v1588
        %v1590 = vrot.slane %v1337, %v1589
        %v1592 = vunpack.c.l.s4 1983009808
        %v1593 = vunpack.c.0.s8 %v1592
        %v1594 = vlaneseq
        %v1595 = vshrl.u32 %v1594, 7
        %v1596 = vsub.s32 %v1593, %v1595
        %v1597 = vrot.slane %v1338, %v1596
        %v1599 = vunpack.c.l.s4 1983009808
        %v1600 = vunpack.c.0.s8 %v1599
        %v1601 = vlaneseq
        %v1602 = vshrl.u32 %v1601, 7
        %v1603 = vsub.s32 %v1600, %v1602
        %v1604 = vrot.slane %v1339, %v1603
        %v1606 = vunpack.c.l.s4 1983009808
        %v1607 = vunpack.c.0.s8 %v1606
        %v1608 = vlaneseq
        %v1609 = vshrl.u32 %v1608, 7
        %v1610 = vsub.s32 %v1607, %v1609
        %v1611 = vrot.slane %v1340, %v1610
        %v1613 = vunpack.c.l.s4 1983009808
        %v1614 = vunpack.c.0.s8 %v1613
        %v1615 = vlaneseq
        %v1616 = vshrl.u32 %v1615, 7
        %v1617 = vsub.s32 %v1614, %v1616
        %v1618 = vrot.slane %v1341, %v1617
        %v1620 = vunpack.c.l.s4 1983009808
        %v1621 = vunpack.c.0.s8 %v1620
        %v1622 = vlaneseq
        %v1623 = vshrl.u32 %v1622, 7
        %v1624 = vsub.s32 %v1621, %v1623
        %v1625 = vrot.slane %v1342, %v1624
        %v1627 = vunpack.c.l.s4 1983009808
        %v1628 = vunpack.c.0.s8 %v1627
        %v1629 = vlaneseq
        %v1630 = vshrl.u32 %v1629, 7
        %v1631 = vsub.s32 %v1628, %v1630
        %v1632 = vrot.slane %v1343, %v1631
        %v1634 = vunpack.c.l.s4 1983009808
        %v1635 = vunpack.c.0.s8 %v1634
        %v1636 = vlaneseq
        %v1637 = vshrl.u32 %v1636, 7
        %v1638 = vsub.s32 %v1635, %v1637
        %v1639 = vrot.slane %v1344, %v1638
        %v1640 = vunpack.c.l.b16 %v1590
        %v1641 = vunpack.c.l.b16 %v1597
        %v1642 = vunpack.c.l.b16 %v1604
        %v1643 = vunpack.c.l.b16 %v1611
        %v1644 = vunpack.c.l.b16 %v1618
        %v1645 = vunpack.c.l.b16 %v1625
        %v1646 = vunpack.c.l.b16 %v1632
        %v1647 = vunpack.c.l.b16 %v1639
        %v1648 = vrot.slane %v1640, 2
        %v1649 = vrot.slane %v1641, 1
        %v1650 = vsel %vm596, %v1649, %v1648
        %v1651 = vsel %vm599, %v1642, %v1650
        %v1652 = vrot.slane %v1643, 7
        %v1653 = vsel %vm602, %v1652, %v1651
        %v1654 = vrot.slane %v1644, 6
        %v1655 = vsel %vm605, %v1654, %v1653
        %v1656 = vrot.slane %v1645, 5
        %v1657 = vsel %vm608, %v1656, %v1655
        %v1658 = vrot.slane %v1646, 4
        %v1659 = vsel %vm611, %v1658, %v1657
        %v1660 = vrot.slane %v1647, 3
        %v1661 = vsel %vm614, %v1660, %v1659
        %v1662 = vpack.c.b16 %v1661, %v1661
        %v1664 = vsel %vm489, %v1575, 0
        %v1667 = vsel %vm851, %v1662, 0
        %1669 = vmatprep.subr.bf16.mxu0 0
        %1670 = vmatpush1.bf16.msra.mxu0 %v1667
        %1671 = vmatprep.subr.bf16.mxu0 0
        %1672 = vmatpush1.bf16.msra.mxu0 0
        %1673 = vmatprep.subr.bf16.mxu0 0
        %1674 = vmatpush1.bf16.msra.mxu0 0
        %1675 = vmatprep.subr.bf16.mxu0 0
        %1676 = vmatpush1.bf16.msra.mxu0 0
        %1677 = vmatprep.subr.bf16.mxu0 0
        %1678 = vmatpush1.bf16.msra.mxu0 0
        %1679 = vmatprep.subr.bf16.mxu0 0
        %1680 = vmatpush1.bf16.msra.mxu0 0
        %1681 = vmatprep.subr.bf16.mxu0 0
        %1682 = vmatpush1.bf16.msra.mxu0 0
        %1683 = vmatprep.subr.bf16.mxu0 0
        %1684 = vmatpush1.bf16.msra.mxu0 0
        %1685 = vmatprep.subr.bf16.mxu0 0
        %1686 = vmatpush1.bf16.msra.mxu0 0
        %1687 = vmatprep.subr.bf16.mxu0 0
        %1688 = vmatpush1.bf16.msra.mxu0 0
        %1689 = vmatprep.subr.bf16.mxu0 0
        %1690 = vmatpush1.bf16.msra.mxu0 0
        %1691 = vmatprep.subr.bf16.mxu0 0
        %1692 = vmatpush1.bf16.msra.mxu0 0
        %1693 = vmatprep.subr.bf16.mxu0 0
        %1694 = vmatpush1.bf16.msra.mxu0 0
        %1695 = vmatprep.subr.bf16.mxu0 0
        %1696 = vmatpush1.bf16.msra.mxu0 0
        %1697 = vmatprep.subr.bf16.mxu0 0
        %1698 = vmatpush1.bf16.msra.mxu0 0
        %1699 = vmatprep.subr.bf16.mxu0 0
        %1700 = vmatpush1.bf16.msra.mxu0 0
        %1701 = vmatprep.mubr.bf16.mxu0 0
        %1702 = vmatmul.mubr.bf16.gmra.mrb[0].mxu0 %v1664
        %v1703 = vpop.f32.mrb[0].mxu0
        %v1704 = vadd.f32 0.0, %v1703
        %v1705 = vpop.f32.mrb[0].mxu0
        %v1706 = vpop.f32.mrb[0].mxu0
        %v1707 = vpop.f32.mrb[0].mxu0
        %1708 = vdwg.mxu0
        %v1709 = vmul.f32 %v1704, %v1574
        %v1710 = vpack.c.bf16 %v1709, %v1709
        %v1712 = vunpack.c.l.b16 %v1710
        %v1713 = vpack.c.b16 %v1712, %v1712
        %1714 = vrot.lane.b32.xlu0 %v1713, 16
        %v1715 = vpop.permute.xlu0 %1714
        %vm1717 = vcmask 191616
        %1718 = vst.msk [vmem:[%s486] sm:$0xf] %vm1717, %v1715
        %v1719 = vld [vmem:[%s478] sm:$0xff]
        %v1720 = vmul.f32 %v1570, %v1574
        %v1721 = vadd.f32 %v1719, %v1720
        %1722 = vst.msk [vmem:[%s478] sm:$0xff] %vm489, %v1721
        %v1723 = vld [vmem:[%s427] sm:$0x2]
        %v1724 = vld [vmem:[%s427 + $0x2] sm:$0x2]
        %v1725 = vld [vmem:[%s427 + $0x4] sm:$0x2]
        %v1726 = vld [vmem:[%s427 + $0x6] sm:$0x2]
        %v1727 = vld [vmem:[%s427 + $0x8] sm:$0x2]
        %v1728 = vld [vmem:[%s427 + $0xa] sm:$0x2]
        %v1729 = vld [vmem:[%s427 + $0xc] sm:$0x2]
        %v1730 = vld [vmem:[%s427 + $0xe] sm:$0x2]
        %v1731 = vmul.bf16 %v1723, 1052065461
        %v1732 = vmul.bf16 %v1724, 1052065461
        %v1733 = vmul.bf16 %v1725, 1052065461
        %v1734 = vmul.bf16 %v1726, 1052065461
        %v1735 = vmul.bf16 %v1727, 1052065461
        %v1736 = vmul.bf16 %v1728, 1052065461
        %v1737 = vmul.bf16 %v1729, 1052065461
        %v1738 = vmul.bf16 %v1730, 1052065461
        %v1739 = vld [vmem:[%s434] sm:$0x2]
        %v1740 = vld [vmem:[%s434 + $0x2] sm:$0x2]
        %v1741 = vld [vmem:[%s434 + $0x4] sm:$0x2]
        %v1742 = vld [vmem:[%s434 + $0x6] sm:$0x2]
        %v1743 = vld [vmem:[%s434 + $0x8] sm:$0x2]
        %v1744 = vld [vmem:[%s434 + $0xa] sm:$0x2]
        %v1745 = vld [vmem:[%s434 + $0xc] sm:$0x2]
        %v1746 = vld [vmem:[%s434 + $0xe] sm:$0x2]
        %v1747 = vld [vmem:[%s441] sm:$0x2]
        %v1748 = vld [vmem:[%s441 + $0x2] sm:$0x2]
        %v1749 = vld [vmem:[%s441 + $0x4] sm:$0x2]
        %v1750 = vld [vmem:[%s441 + $0x6] sm:$0x2]
        %v1751 = vld [vmem:[%s441 + $0x8] sm:$0x2]
        %v1752 = vld [vmem:[%s441 + $0xa] sm:$0x2]
        %v1753 = vld [vmem:[%s441 + $0xc] sm:$0x2]
        %v1754 = vld [vmem:[%s441 + $0xe] sm:$0x2]
        %v1764 = vunpack.c.l.s4 1983009808
        %v1765 = vunpack.c.0.s8 %v1764
        %v1766 = vlaneseq
        %v1767 = vshrl.u32 %v1766, 7
        %v1768 = vsub.s32 %v1765, %v1767
        %v1769 = vrot.slane %v1731, %v1768
        %v1771 = vunpack.c.l.s4 1983009808
        %v1772 = vunpack.c.0.s8 %v1771
        %v1773 = vlaneseq
        %v1774 = vshrl.u32 %v1773, 7
        %v1775 = vsub.s32 %v1772, %v1774
        %v1776 = vrot.slane %v1732, %v1775
        %v1778 = vunpack.c.l.s4 1983009808
        %v1779 = vunpack.c.0.s8 %v1778
        %v1780 = vlaneseq
        %v1781 = vshrl.u32 %v1780, 7
        %v1782 = vsub.s32 %v1779, %v1781
        %v1783 = vrot.slane %v1733, %v1782
        %v1785 = vunpack.c.l.s4 1983009808
        %v1786 = vunpack.c.0.s8 %v1785
        %v1787 = vlaneseq
        %v1788 = vshrl.u32 %v1787, 7
        %v1789 = vsub.s32 %v1786, %v1788
        %v1790 = vrot.slane %v1734, %v1789
        %v1792 = vunpack.c.l.s4 1983009808
        %v1793 = vunpack.c.0.s8 %v1792
        %v1794 = vlaneseq
        %v1795 = vshrl.u32 %v1794, 7
        %v1796 = vsub.s32 %v1793, %v1795
        %v1797 = vrot.slane %v1735, %v1796
        %v1799 = vunpack.c.l.s4 1983009808
        %v1800 = vunpack.c.0.s8 %v1799
        %v1801 = vlaneseq
        %v1802 = vshrl.u32 %v1801, 7
        %v1803 = vsub.s32 %v1800, %v1802
        %v1804 = vrot.slane %v1736, %v1803
        %v1806 = vunpack.c.l.s4 1983009808
        %v1807 = vunpack.c.0.s8 %v1806
        %v1808 = vlaneseq
        %v1809 = vshrl.u32 %v1808, 7
        %v1810 = vsub.s32 %v1807, %v1809
        %v1811 = vrot.slane %v1737, %v1810
        %v1813 = vunpack.c.l.s4 1983009808
        %v1814 = vunpack.c.0.s8 %v1813
        %v1815 = vlaneseq
        %v1816 = vshrl.u32 %v1815, 7
        %v1817 = vsub.s32 %v1814, %v1816
        %v1818 = vrot.slane %v1738, %v1817
        %v1819 = vunpack.c.l.b16 %v1769
        %v1820 = vunpack.c.l.b16 %v1776
        %v1821 = vunpack.c.l.b16 %v1783
        %v1822 = vunpack.c.l.b16 %v1790
        %v1823 = vunpack.c.l.b16 %v1797
        %v1824 = vunpack.c.l.b16 %v1804
        %v1825 = vunpack.c.l.b16 %v1811
        %v1826 = vunpack.c.l.b16 %v1818
        %v1827 = vrot.slane %v1819, 3
        %v1828 = vrot.slane %v1820, 2
        %v1829 = vsel %vm596, %v1828, %v1827
        %v1830 = vrot.slane %v1821, 1
        %v1831 = vsel %vm599, %v1830, %v1829
        %v1832 = vsel %vm602, %v1822, %v1831
        %v1833 = vrot.slane %v1823, 7
        %v1834 = vsel %vm605, %v1833, %v1832
        %v1835 = vrot.slane %v1824, 6
        %v1836 = vsel %vm608, %v1835, %v1834
        %v1837 = vrot.slane %v1825, 5
        %v1838 = vsel %vm611, %v1837, %v1836
        %v1839 = vrot.slane %v1826, 4
        %v1840 = vsel %vm614, %v1839, %v1838
        %v1841 = vpack.c.b16 %v1840, %v1840
        %v1851 = vunpack.c.l.s4 1983009808
        %v1852 = vunpack.c.0.s8 %v1851
        %v1853 = vlaneseq
        %v1854 = vshrl.u32 %v1853, 7
        %v1855 = vsub.s32 %v1852, %v1854
        %v1856 = vrot.slane %v1739, %v1855
        %v1858 = vunpack.c.l.s4 1983009808
        %v1859 = vunpack.c.0.s8 %v1858
        %v1860 = vlaneseq
        %v1861 = vshrl.u32 %v1860, 7
        %v1862 = vsub.s32 %v1859, %v1861
        %v1863 = vrot.slane %v1740, %v1862
        %v1865 = vunpack.c.l.s4 1983009808
        %v1866 = vunpack.c.0.s8 %v1865
        %v1867 = vlaneseq
        %v1868 = vshrl.u32 %v1867, 7
        %v1869 = vsub.s32 %v1866, %v1868
        %v1870 = vrot.slane %v1741, %v1869
        %v1872 = vunpack.c.l.s4 1983009808
        %v1873 = vunpack.c.0.s8 %v1872
        %v1874 = vlaneseq
        %v1875 = vshrl.u32 %v1874, 7
        %v1876 = vsub.s32 %v1873, %v1875
        %v1877 = vrot.slane %v1742, %v1876
        %v1879 = vunpack.c.l.s4 1983009808
        %v1880 = vunpack.c.0.s8 %v1879
        %v1881 = vlaneseq
        %v1882 = vshrl.u32 %v1881, 7
        %v1883 = vsub.s32 %v1880, %v1882
        %v1884 = vrot.slane %v1743, %v1883
        %v1886 = vunpack.c.l.s4 1983009808
        %v1887 = vunpack.c.0.s8 %v1886
        %v1888 = vlaneseq
        %v1889 = vshrl.u32 %v1888, 7
        %v1890 = vsub.s32 %v1887, %v1889
        %v1891 = vrot.slane %v1744, %v1890
        %v1893 = vunpack.c.l.s4 1983009808
        %v1894 = vunpack.c.0.s8 %v1893
        %v1895 = vlaneseq
        %v1896 = vshrl.u32 %v1895, 7
        %v1897 = vsub.s32 %v1894, %v1896
        %v1898 = vrot.slane %v1745, %v1897
        %v1900 = vunpack.c.l.s4 1983009808
        %v1901 = vunpack.c.0.s8 %v1900
        %v1902 = vlaneseq
        %v1903 = vshrl.u32 %v1902, 7
        %v1904 = vsub.s32 %v1901, %v1903
        %v1905 = vrot.slane %v1746, %v1904
        %v1906 = vunpack.c.l.b16 %v1856
        %v1907 = vunpack.c.l.b16 %v1863
        %v1908 = vunpack.c.l.b16 %v1870
        %v1909 = vunpack.c.l.b16 %v1877
        %v1910 = vunpack.c.l.b16 %v1884
        %v1911 = vunpack.c.l.b16 %v1891
        %v1912 = vunpack.c.l.b16 %v1898
        %v1913 = vunpack.c.l.b16 %v1905
        %v1914 = vrot.slane %v1906, 3
        %v1915 = vrot.slane %v1907, 2
        %v1916 = vsel %vm596, %v1915, %v1914
        %v1917 = vrot.slane %v1908, 1
        %v1918 = vsel %vm599, %v1917, %v1916
        %v1919 = vsel %vm602, %v1909, %v1918
        %v1920 = vrot.slane %v1910, 7
        %v1921 = vsel %vm605, %v1920, %v1919
        %v1922 = vrot.slane %v1911, 6
        %v1923 = vsel %vm608, %v1922, %v1921
        %v1924 = vrot.slane %v1912, 5
        %v1925 = vsel %vm611, %v1924, %v1923
        %v1926 = vrot.slane %v1913, 4
        %v1927 = vsel %vm614, %v1926, %v1925
        %v1928 = vpack.c.b16 %v1927, %v1927
        %v1930 = vsel %vm489, %v1841, 0
        %v1933 = vsel %vm489, %v1928, 0
        %1935 = vmatprep.subr.bf16.mxu0 0
        %1936 = vmatpush1.bf16.xpose.msra.mxu0 %v1933
        %1937 = vmatprep.subr.bf16.mxu0 0
        %1938 = vmatpush1.bf16.xpose.msra.mxu0 0
        %1939 = vmatprep.subr.bf16.mxu0 0
        %1940 = vmatpush1.bf16.xpose.msra.mxu0 0
        %1941 = vmatprep.subr.bf16.mxu0 0
        %1942 = vmatpush1.bf16.xpose.msra.mxu0 0
        %1943 = vmatprep.subr.bf16.mxu0 0
        %1944 = vmatpush1.bf16.xpose.msra.mxu0 0
        %1945 = vmatprep.subr.bf16.mxu0 0
        %1946 = vmatpush1.bf16.xpose.msra.mxu0 0
        %1947 = vmatprep.subr.bf16.mxu0 0
        %1948 = vmatpush1.bf16.xpose.msra.mxu0 0
        %1949 = vmatprep.subr.bf16.mxu0 0
        %1950 = vmatpush1.bf16.xpose.msra.mxu0 0
        %1951 = vmatprep.subr.bf16.mxu0 0
        %1952 = vmatpush1.bf16.xpose.msra.mxu0 0
        %1953 = vmatprep.subr.bf16.mxu0 0
        %1954 = vmatpush1.bf16.xpose.msra.mxu0 0
        %1955 = vmatprep.subr.bf16.mxu0 0
        %1956 = vmatpush1.bf16.xpose.msra.mxu0 0
        %1957 = vmatprep.subr.bf16.mxu0 0
        %1958 = vmatpush1.bf16.xpose.msra.mxu0 0
        %1959 = vmatprep.subr.bf16.mxu0 0
        %1960 = vmatpush1.bf16.xpose.msra.mxu0 0
        %1961 = vmatprep.subr.bf16.mxu0 0
        %1962 = vmatpush1.bf16.xpose.msra.mxu0 0
        %1963 = vmatprep.subr.bf16.mxu0 0
        %1964 = vmatpush1.bf16.xpose.msra.mxu0 0
        %1965 = vmatprep.subr.bf16.mxu0 0
        %1966 = vmatpush1.bf16.xpose.msra.mxu0 0
        %1967 = vmatprep.mubr.bf16.mxu0 0
        %1968 = vmatmul.mubr.bf16.gmra.mrb[0].mxu0 %v1930
        %v1969 = vpop.f32.mrb[0].mxu0
        %v1970 = vadd.f32 0.0, %v1969
        %v1971 = vpop.f32.mrb[0].mxu0
        %v1972 = vpop.f32.mrb[0].mxu0
        %v1973 = vpop.f32.mrb[0].mxu0
        %1974 = vdwg.mxu0
        %v1975 = vsel %vm489, %v1970, -inf
        %1976 = vmax.xlane.f32.xlu0 %v1975
        %v1977 = vpop.xlane.xlu0 %1976
        %v1978 = vsub.f32 %v1970, %v1977
        %v1979 = vmul.f32 %v1978, 1.442695
        %v1980 = vpow.pop %v1979
        %v1981 = vsel %vm489, %v1980, 0.0
        %1982 = vadd.xlane.f32.xlu0 %v1981
        %v1983 = vpop.xlane.xlu0 %1982
        %v1984 = vrcp.pop %v1983
        %v1985 = vpack.c.bf16 %v1980, %v1980
        %v1995 = vunpack.c.l.s4 1983009808
        %v1996 = vunpack.c.0.s8 %v1995
        %v1997 = vlaneseq
        %v1998 = vshrl.u32 %v1997, 7
        %v1999 = vsub.s32 %v1996, %v1998
        %v2000 = vrot.slane %v1747, %v1999
        %v2002 = vunpack.c.l.s4 1983009808
        %v2003 = vunpack.c.0.s8 %v2002
        %v2004 = vlaneseq
        %v2005 = vshrl.u32 %v2004, 7
        %v2006 = vsub.s32 %v2003, %v2005
        %v2007 = vrot.slane %v1748, %v2006
        %v2009 = vunpack.c.l.s4 1983009808
        %v2010 = vunpack.c.0.s8 %v2009
        %v2011 = vlaneseq
        %v2012 = vshrl.u32 %v2011, 7
        %v2013 = vsub.s32 %v2010, %v2012
        %v2014 = vrot.slane %v1749, %v2013
        %v2016 = vunpack.c.l.s4 1983009808
        %v2017 = vunpack.c.0.s8 %v2016
        %v2018 = vlaneseq
        %v2019 = vshrl.u32 %v2018, 7
        %v2020 = vsub.s32 %v2017, %v2019
        %v2021 = vrot.slane %v1750, %v2020
        %v2023 = vunpack.c.l.s4 1983009808
        %v2024 = vunpack.c.0.s8 %v2023
        %v2025 = vlaneseq
        %v2026 = vshrl.u32 %v2025, 7
        %v2027 = vsub.s32 %v2024, %v2026
        %v2028 = vrot.slane %v1751, %v2027
        %v2030 = vunpack.c.l.s4 1983009808
        %v2031 = vunpack.c.0.s8 %v2030
        %v2032 = vlaneseq
        %v2033 = vshrl.u32 %v2032, 7
        %v2034 = vsub.s32 %v2031, %v2033
        %v2035 = vrot.slane %v1752, %v2034
        %v2037 = vunpack.c.l.s4 1983009808
        %v2038 = vunpack.c.0.s8 %v2037
        %v2039 = vlaneseq
        %v2040 = vshrl.u32 %v2039, 7
        %v2041 = vsub.s32 %v2038, %v2040
        %v2042 = vrot.slane %v1753, %v2041
        %v2044 = vunpack.c.l.s4 1983009808
        %v2045 = vunpack.c.0.s8 %v2044
        %v2046 = vlaneseq
        %v2047 = vshrl.u32 %v2046, 7
        %v2048 = vsub.s32 %v2045, %v2047
        %v2049 = vrot.slane %v1754, %v2048
        %v2050 = vunpack.c.l.b16 %v2000
        %v2051 = vunpack.c.l.b16 %v2007
        %v2052 = vunpack.c.l.b16 %v2014
        %v2053 = vunpack.c.l.b16 %v2021
        %v2054 = vunpack.c.l.b16 %v2028
        %v2055 = vunpack.c.l.b16 %v2035
        %v2056 = vunpack.c.l.b16 %v2042
        %v2057 = vunpack.c.l.b16 %v2049
        %v2058 = vrot.slane %v2050, 3
        %v2059 = vrot.slane %v2051, 2
        %v2060 = vsel %vm596, %v2059, %v2058
        %v2061 = vrot.slane %v2052, 1
        %v2062 = vsel %vm599, %v2061, %v2060
        %v2063 = vsel %vm602, %v2053, %v2062
        %v2064 = vrot.slane %v2054, 7
        %v2065 = vsel %vm605, %v2064, %v2063
        %v2066 = vrot.slane %v2055, 6
        %v2067 = vsel %vm608, %v2066, %v2065
        %v2068 = vrot.slane %v2056, 5
        %v2069 = vsel %vm611, %v2068, %v2067
        %v2070 = vrot.slane %v2057, 4
        %v2071 = vsel %vm614, %v2070, %v2069
        %v2072 = vpack.c.b16 %v2071, %v2071
        %v2074 = vsel %vm489, %v1985, 0
        %v2077 = vsel %vm851, %v2072, 0
        %2079 = vmatprep.subr.bf16.mxu0 0
        %2080 = vmatpush1.bf16.msra.mxu0 %v2077
        %2081 = vmatprep.subr.bf16.mxu0 0
        %2082 = vmatpush1.bf16.msra.mxu0 0
        %2083 = vmatprep.subr.bf16.mxu0 0
        %2084 = vmatpush1.bf16.msra.mxu0 0
        %2085 = vmatprep.subr.bf16.mxu0 0
        %2086 = vmatpush1.bf16.msra.mxu0 0
        %2087 = vmatprep.subr.bf16.mxu0 0
        %2088 = vmatpush1.bf16.msra.mxu0 0
        %2089 = vmatprep.subr.bf16.mxu0 0
        %2090 = vmatpush1.bf16.msra.mxu0 0
        %2091 = vmatprep.subr.bf16.mxu0 0
        %2092 = vmatpush1.bf16.msra.mxu0 0
        %2093 = vmatprep.subr.bf16.mxu0 0
        %2094 = vmatpush1.bf16.msra.mxu0 0
        %2095 = vmatprep.subr.bf16.mxu0 0
        %2096 = vmatpush1.bf16.msra.mxu0 0
        %2097 = vmatprep.subr.bf16.mxu0 0
        %2098 = vmatpush1.bf16.msra.mxu0 0
        %2099 = vmatprep.subr.bf16.mxu0 0
        %2100 = vmatpush1.bf16.msra.mxu0 0
        %2101 = vmatprep.subr.bf16.mxu0 0
        %2102 = vmatpush1.bf16.msra.mxu0 0
        %2103 = vmatprep.subr.bf16.mxu0 0
        %2104 = vmatpush1.bf16.msra.mxu0 0
        %2105 = vmatprep.subr.bf16.mxu0 0
        %2106 = vmatpush1.bf16.msra.mxu0 0
        %2107 = vmatprep.subr.bf16.mxu0 0
        %2108 = vmatpush1.bf16.msra.mxu0 0
        %2109 = vmatprep.subr.bf16.mxu0 0
        %2110 = vmatpush1.bf16.msra.mxu0 0
        %2111 = vmatprep.mubr.bf16.mxu0 0
        %2112 = vmatmul.mubr.bf16.gmra.mrb[0].mxu0 %v2074
        %v2113 = vpop.f32.mrb[0].mxu0
        %v2114 = vadd.f32 0.0, %v2113
        %v2115 = vpop.f32.mrb[0].mxu0
        %v2116 = vpop.f32.mrb[0].mxu0
        %v2117 = vpop.f32.mrb[0].mxu0
        %2118 = vdwg.mxu0
        %v2119 = vmul.f32 %v2114, %v1984
        %v2120 = vpack.c.bf16 %v2119, %v2119
        %v2122 = vunpack.c.l.b16 %v2120
        %v2123 = vpack.c.b16 %v2122, %v2122
        %2124 = vrot.lane.b32.xlu0 %v2123, 24
        %v2125 = vpop.permute.xlu0 %2124
        %vm2127 = vcmask 257216
        %2128 = vst.msk [vmem:[%s486] sm:$0xf] %vm2127, %v2125
        %v2129 = vld [vmem:[%s478] sm:$0xff]
        %v2130 = vmul.f32 %v1980, %v1984
        %v2131 = vadd.f32 %v2129, %v2130
        %2132 = vst.msk [vmem:[%s478] sm:$0xff] %vm489, %v2131
        %v2133 = vld [vmem:[%s478] sm:$0xff]
        %v2134 = vmul.f32 %v2133, 0.25
        %2135 = vst.msk [vmem:[%s478] sm:$0xff] %vm489, %v2134
        %p2136 = scmp.lt.s32.totalorder %s23, 1
        %s2137 = scalar_select %p2136, %s23, 1
        %p2138 = scmp.lt.s32.totalorder %s24, 0
        %s2139 = scalar_select %p2138, %s24, 0
        %s2140 = sadd.s32 %s2139, %s2137
        %s2141 = smul.addr %s2140, 4
        %s2142 = scalar_lea.vmem %s3, %s2141
        %s2143 = sand.u32 %s149, 1
        %s2144 = scalar_lea.sflag [#allocation6], %s2143
        %s2145 = sand.u32 %s149, 1
        %s2146 = smul.addr %s2145, 8
        %s2147 = scalar_lea.vmem [#allocation5], %s2146
        // Predicated region
        $region156: #{_lambda_.4} parent=142 // pred_check
          %p2148 = pneg %p131
        $region157: #{_lambda_.4} parent=142 // pred_check_branch
          %2150 = sbr.rel (%p2148) target = $region159
        $region158: #{_lambda_.4} parent=142 // pred_region
          _
        $region159: #{_lambda_.4} parent=142 // pred_fallthru
          _
        // Predicated region
        $region160: #{_lambda_.4} parent=142 // pred_check
          %p2151 = pneg %p159
        $region161: #{_lambda_.4} parent=142 // pred_check_branch
          %2153 = sbr.rel (%p2151) target = $region163
        $region162: #{_lambda_.4} parent=142 // pred_region
          %s2155 = ssub.s32 128, 128
          %2156 = vsyncadd %s2144, %s2155
          %s2157 = sadd.s32 %s24, %s23
          %s2158 = smul.addr %s2157, 128
          %s2159 = scalar_lea.hbm %s4, %s2158
          %s2161 = sshll.u32 %s2147, 4
          %s2162 = int_to_ptr.vmem [resolvable:$true] %s2161
          %2164 = dma.vmem_to_hbm [thread:$0]  %s2162, 128, %s2159, %s2144
        $region163: #{_lambda_.4} parent=142 // pred_fallthru
          _
      $region143: #{_lambda_.4} parent=5 // pred_fallthru
        _
      %p2165 = scmp.le.s32.totalorder 2, %s14
      // Predicated region
      $region164: #{_lambda_.4} parent=5 // pred_check
        %p2166 = pneg %p2165
      $region165: #{_lambda_.4} parent=5 // pred_check_branch
        %2168 = sbr.rel (%p2166) target = $region167
      $region166: #{_lambda_.4} parent=5 // pred_region
        %s2169 = ssub.s32 %s14, 2
        // Predicated region
        $region168: #{_lambda_.4} parent=166 // pred_check
          %p2170 = pneg %p137
        $region169: #{_lambda_.4} parent=166 // pred_check_branch
          %2172 = sbr.rel (%p2170) target = $region171
        $region170: #{_lambda_.4} parent=166 // pred_region
          %p2173 = scmp.lt.s32.totalorder %s25, 1
          %s2174 = scalar_select %p2173, %s25, 1
          %p2175 = scmp.lt.s32.totalorder %s26, 0
          %s2176 = scalar_select %p2175, %s26, 0
          %s2177 = sadd.s32 %s2176, %s2174
          %s2178 = smul.addr %s2177, 4
          %s2179 = scalar_lea.vmem %s3, %s2178
        $region171: #{_lambda_.4} parent=166 // pred_fallthru
          _
        // Predicated region
        $region172: #{_lambda_.4} parent=166 // pred_check
          %p2180 = pneg %p165
        $region173: #{_lambda_.4} parent=166 // pred_check_branch
          %2182 = sbr.rel (%p2180) target = $region175
        $region174: #{_lambda_.4} parent=166 // pred_region
          %s2183 = sand.u32 %s150, 1
          %s2184 = scalar_lea.sflag [#allocation6], %s2183
          %s2185 = sand.u32 %s150, 1
          %s2186 = smul.addr %s2185, 8
          %s2187 = scalar_lea.vmem [#allocation5], %s2186
          %2188 = dma.done %s2184, 128
        $region175: #{_lambda_.4} parent=166 // pred_fallthru
          _
      $region167: #{_lambda_.4} parent=5 // pred_fallthru
        _
    $region6: #{_lambda_.4} parent=1 // loop_footer
      %s18 = sadd.s32 1, %s14
    $region7: #{_lambda_.4} parent=1 // loop_footer_branch
      %13 = sbr.rel target = $region3
    $region8: #{_lambda_.4} parent=1 // loop_exit
      _
    %2189 = vsyncpa [#allocation6], 1
    %s2190 = scalar_lea.sflag [#allocation6], 1
    %2191 = vsyncpa %s2190, 1

</llo_original>
